<compile_context>
chip_gen: v7x
topology: tpu7x:2x2x1
jax: 0.10.0
libtpu: 0.0.40
codegen_flags: <defaults>
</compile_context>

<pallas_src>
import functools

import jax
import jax.numpy as jnp
from jax.experimental import pallas as pl
from jax.experimental.pallas import tpu as pltpu

VMEM_SPEC = pl.BlockSpec(memory_space=pltpu.MemorySpace.VMEM)


# ---------------------------------------------------------------------------
# Fused VAT kernel
# ---------------------------------------------------------------------------
def _vat_kernel(xi, eps, ip, num_classes, inv_b,
                x_ref, d_ref, w_ref, b_ref, lds_ref):
    x = x_ref[...]                      # (B, D)  f32
    w = w_ref[...]                      # (D, CP) bf16  (zero-padded classes)
    b = b_ref[...]                      # (1, CP) f32
    cp = b.shape[-1]
    cls_mask = jax.lax.broadcasted_iota(jnp.int32, (1, cp), 1) < num_classes

    def linear(xp):
        # bf16 MXU matmul with f32 accumulate; perturbation math stays f32.
        return jnp.dot(xp.astype(jnp.bfloat16), w,
                       preferred_element_type=jnp.float32) + b

    def masked_log_softmax(z):
        z = jnp.where(cls_mask, z, jnp.float32(-1e30))
        zs = z - jnp.max(z, axis=-1, keepdims=True)
        e = jnp.where(cls_mask, jnp.exp(zs), 0.0)
        s = jnp.sum(e, axis=-1, keepdims=True)
        logp = jnp.where(cls_mask, zs - jnp.log(s), 0.0)
        p = e * pl.reciprocal(s)
        return logp, p

    def l2_normalize(v):
        nrm = jnp.sqrt(jnp.sum(v * v, axis=-1, keepdims=True))
        return v * pl.reciprocal(nrm + jnp.float32(1e-8), approx=True)

    # pred = softmax(model(x)); log_pred via log-softmax (no log(0) hazard).
    log_pred, pred = masked_log_softmax(linear(x))
    ent = jnp.sum(pred * log_pred, keepdims=True)             # (1, 1) constant

    # d = l2_normalize(rand(x.shape) - 0.5)
    d = l2_normalize(d_ref[...])

    # Power iteration for the adversarial direction. Analytic backward through
    # the linear model; xi and 1/B scales are dropped (l2-norm invariant).
    for _ in range(ip):
        _, p_hat = masked_log_softmax(linear(x + jnp.float32(xi) * d))
        g = jax.lax.dot_general(
            (p_hat - pred).astype(jnp.bfloat16), w,
            dimension_numbers=(((1,), (1,)), ((), ())),       # contract classes
            preferred_element_type=jnp.float32)               # (B, D)
        d = l2_normalize(g)

    # LDS = KL(pred || softmax(model(x + eps * d))), reduction='batchmean'.
    logp_hat, _ = masked_log_softmax(linear(x + jnp.float32(eps) * d))
    cross = jnp.sum(pred * logp_hat, keepdims=True)
    lds_ref[...] = (ent - cross) * jnp.float32(inv_b)


# ---------------------------------------------------------------------------
# Wrapper
# ---------------------------------------------------------------------------
def vat_loss(x, w, b, key, xi=0.1, eps=1.0, ip=1):
    B = x.shape[0]
    D, num_classes = w.shape
    x_flat = x.reshape(B, D).astype(jnp.float32)

    # Lane-dense class axis: pad W/b to a multiple of 128 (zero columns).
    cp = max(128, pl.cdiv(num_classes, 128) * 128)
    w_pad = jnp.pad(w.astype(jnp.bfloat16), ((0, 0), (0, cp - num_classes)))
    b_pad = jnp.pad(b.reshape(1, -1).astype(jnp.float32),
                    ((0, 0), (0, cp - num_classes)))

    # d0 = rand(x.shape) - 0.5 (RNG stays in plain JAX; normalized in-kernel).
    d0 = (jax.random.uniform(key, x.shape, dtype=jnp.float32) - 0.5).reshape(B, D)

    kernel = functools.partial(_vat_kernel, float(xi), float(eps), int(ip),
                               int(num_classes), 1.0 / float(B))
    lds = pl.pallas_call(
        kernel,
        out_shape=jax.ShapeDtypeStruct((1, 1), jnp.float32),
        in_specs=[VMEM_SPEC] * 4,
        out_specs=VMEM_SPEC,
    )(x_flat, d0, w_pad, b_pad)
    return lds[0, 0]


if __name__ == "__main__":
    key = jax.random.PRNGKey(0)
    kx, kw, kd = jax.random.split(key, 3)

    B, C, H, W = 2, 4, 16, 16
    NUM_CLASSES = 10
    D = C * H * W

    x = jax.random.normal(kx, (B, C, H, W), dtype=jnp.float32)
    # deterministic synthetic "model" parameters (linear classifier)
    w = jax.random.normal(kw, (D, NUM_CLASSES), dtype=jnp.float32) / jnp.sqrt(
        jnp.float32(D))
    b_param = jnp.zeros((1, NUM_CLASSES), dtype=jnp.float32)

    lds = vat_loss(x, w, b_param, kd, xi=0.1, eps=1.0, ip=1)
    lds = jax.block_until_ready(lds)
    assert bool(jnp.isfinite(lds))
    print("KERNEL_OK")
</pallas_src>

<mosaic_0001>
module attributes {stable_mosaic.version = 11 : i64} {
  func.func @_vat_kernel(%arg0: memref<2x1024xf32, #tpu.memory_space<vmem>>, %arg1: memref<2x1024xf32, #tpu.memory_space<vmem>>, %arg2: memref<1024x128xbf16, #tpu.memory_space<vmem>>, %arg3: memref<1x128xf32, #tpu.memory_space<vmem>>, %arg4: memref<1x1xf32, #tpu.memory_space<vmem>>) attributes {dimension_semantics = [], scalar_prefetch = 0 : i64, scratch_operands = 0 : i64, tpu.core_type = #tpu.core_type<tc>} {
    %c0 = arith.constant 0 : index
    %c0_0 = arith.constant 0 : index
    %0 = vector.load %arg0[%c0, %c0_0] : memref<2x1024xf32, #tpu.memory_space<vmem>>, vector<2x1024xf32>
    %c0_1 = arith.constant 0 : index
    %c0_2 = arith.constant 0 : index
    %1 = vector.load %arg2[%c0_1, %c0_2] : memref<1024x128xbf16, #tpu.memory_space<vmem>>, vector<1024x128xbf16>
    %c0_3 = arith.constant 0 : index
    %c0_4 = arith.constant 0 : index
    %2 = vector.load %arg3[%c0_3, %c0_4] : memref<1x128xf32, #tpu.memory_space<vmem>>, vector<1x128xf32>
    %3 = tpu.iota {dimensions = array<i32: 1>} : vector<1x128xi32>
    %c10_i32 = arith.constant 10 : i32
    %4 = vector.broadcast %c10_i32 : i32 to vector<1x128xi32>
    %5 = arith.cmpi slt, %3, %4 : vector<1x128xi32>
    %6 = arith.truncf %0 : vector<2x1024xf32> to vector<2x1024xbf16>
    %cst = arith.constant dense<0.000000e+00> : vector<2x128xf32>
    %7 = tpu.matmul %6, %1, %cst {dimension_numbers = #tpu.dot_dimension_numbers<[1], [0], [0], [1], [0, 0, 1, 1], [], []>} : vector<2x1024xbf16>, vector<1024x128xbf16>, vector<2x128xf32> -> vector<2x128xf32>
    %8 = vector.broadcast %2 : vector<1x128xf32> to vector<2x128xf32>
    %9 = arith.addf %7, %8 : vector<2x128xf32>
    %cst_5 = arith.constant -1.000000e+30 : f32
    %10 = vector.shape_cast %5 : vector<1x128xi1> to vector<1x128xi1>
    %11 = vector.broadcast %10 : vector<1x128xi1> to vector<2x128xi1>
    %12 = vector.broadcast %cst_5 : f32 to vector<2x128xf32>
    %13 = arith.select %11, %9, %12 : vector<2x128xi1>, vector<2x128xf32>
    %cst_6 = arith.constant dense<0xFF800000> : vector<2xf32>
    %14 = vector.multi_reduction <maximumf>, %13, %cst_6 [1] : vector<2x128xf32> to vector<2xf32>
    %15 = vector.shape_cast %14 : vector<2xf32> to vector<2x1xf32>
    %16 = vector.broadcast %15 : vector<2x1xf32> to vector<2x128xf32>
    %17 = arith.subf %13, %16 : vector<2x128xf32>
    %18 = math.exp %17 : vector<2x128xf32>
    %cst_7 = arith.constant 0.000000e+00 : f32
    %19 = vector.shape_cast %5 : vector<1x128xi1> to vector<1x128xi1>
    %20 = vector.broadcast %19 : vector<1x128xi1> to vector<2x128xi1>
    %21 = vector.broadcast %cst_7 : f32 to vector<2x128xf32>
    %22 = arith.select %20, %18, %21 : vector<2x128xi1>, vector<2x128xf32>
    %cst_8 = arith.constant dense<0.000000e+00> : vector<2xf32>
    %23 = vector.multi_reduction <add>, %22, %cst_8 [1] : vector<2x128xf32> to vector<2xf32>
    %24 = vector.shape_cast %23 : vector<2xf32> to vector<2x1xf32>
    %25 = math.log %24 : vector<2x1xf32>
    %26 = vector.broadcast %25 : vector<2x1xf32> to vector<2x128xf32>
    %27 = arith.subf %17, %26 : vector<2x128xf32>
    %cst_9 = arith.constant 0.000000e+00 : f32
    %28 = vector.shape_cast %5 : vector<1x128xi1> to vector<1x128xi1>
    %29 = vector.broadcast %28 : vector<1x128xi1> to vector<2x128xi1>
    %30 = vector.broadcast %cst_9 : f32 to vector<2x128xf32>
    %31 = arith.select %29, %27, %30 : vector<2x128xi1>, vector<2x128xf32>
    %32 = tpu.reciprocal %24 : vector<2x1xf32> -> vector<2x1xf32>
    %33 = vector.broadcast %32 : vector<2x1xf32> to vector<2x128xf32>
    %34 = arith.mulf %22, %33 : vector<2x128xf32>
    %35 = arith.mulf %34, %31 : vector<2x128xf32>
    %36 = vector.shape_cast %35 : vector<2x128xf32> to vector<1x2x128xf32>
    %cst_10 = arith.constant dense<0.000000e+00> : vector<1xf32>
    %37 = vector.multi_reduction <add>, %36, %cst_10 [1, 2] : vector<1x2x128xf32> to vector<1xf32>
    %38 = vector.shape_cast %37 : vector<1xf32> to vector<1x1x1xf32>
    %39 = vector.extract %38[0, 0, 0] : f32 from vector<1x1x1xf32>
    %40 = vector.broadcast %39 : f32 to vector<1x1xf32>
    %c0_11 = arith.constant 0 : index
    %c0_12 = arith.constant 0 : index
    %41 = vector.load %arg1[%c0_11, %c0_12] : memref<2x1024xf32, #tpu.memory_space<vmem>>, vector<2x1024xf32>
    %42 = arith.mulf %41, %41 : vector<2x1024xf32>
    %cst_13 = arith.constant dense<0.000000e+00> : vector<2xf32>
    %43 = vector.multi_reduction <add>, %42, %cst_13 [1] : vector<2x1024xf32> to vector<2xf32>
    %44 = vector.shape_cast %43 : vector<2xf32> to vector<2x1xf32>
    %45 = math.sqrt %44 : vector<2x1xf32>
    %cst_14 = arith.constant 9.99999993E-9 : f32
    %46 = vector.broadcast %cst_14 : f32 to vector<2x1xf32>
    %47 = arith.addf %45, %46 : vector<2x1xf32>
    %48 = tpu.reciprocal %47 {approx = true} : vector<2x1xf32> -> vector<2x1xf32>
    %49 = vector.broadcast %48 : vector<2x1xf32> to vector<2x1024xf32>
    %50 = arith.mulf %41, %49 : vector<2x1024xf32>
    %cst_15 = arith.constant 1.000000e-01 : f32
    %51 = vector.broadcast %cst_15 : f32 to vector<2x1024xf32>
    %52 = arith.mulf %51, %50 : vector<2x1024xf32>
    %53 = arith.addf %0, %52 : vector<2x1024xf32>
    %54 = arith.truncf %53 : vector<2x1024xf32> to vector<2x1024xbf16>
    %cst_16 = arith.constant dense<0.000000e+00> : vector<2x128xf32>
    %55 = tpu.matmul %54, %1, %cst_16 {dimension_numbers = #tpu.dot_dimension_numbers<[1], [0], [0], [1], [0, 0, 1, 1], [], []>} : vector<2x1024xbf16>, vector<1024x128xbf16>, vector<2x128xf32> -> vector<2x128xf32>
    %56 = vector.broadcast %2 : vector<1x128xf32> to vector<2x128xf32>
    %57 = arith.addf %55, %56 : vector<2x128xf32>
    %cst_17 = arith.constant -1.000000e+30 : f32
    %58 = vector.shape_cast %5 : vector<1x128xi1> to vector<1x128xi1>
    %59 = vector.broadcast %58 : vector<1x128xi1> to vector<2x128xi1>
    %60 = vector.broadcast %cst_17 : f32 to vector<2x128xf32>
    %61 = arith.select %59, %57, %60 : vector<2x128xi1>, vector<2x128xf32>
    %cst_18 = arith.constant dense<0xFF800000> : vector<2xf32>
    %62 = vector.multi_reduction <maximumf>, %61, %cst_18 [1] : vector<2x128xf32> to vector<2xf32>
    %63 = vector.shape_cast %62 : vector<2xf32> to vector<2x1xf32>
    %64 = vector.broadcast %63 : vector<2x1xf32> to vector<2x128xf32>
    %65 = arith.subf %61, %64 : vector<2x128xf32>
    %66 = math.exp %65 : vector<2x128xf32>
    %cst_19 = arith.constant 0.000000e+00 : f32
    %67 = vector.shape_cast %5 : vector<1x128xi1> to vector<1x128xi1>
    %68 = vector.broadcast %67 : vector<1x128xi1> to vector<2x128xi1>
    %69 = vector.broadcast %cst_19 : f32 to vector<2x128xf32>
    %70 = arith.select %68, %66, %69 : vector<2x128xi1>, vector<2x128xf32>
    %cst_20 = arith.constant dense<0.000000e+00> : vector<2xf32>
    %71 = vector.multi_reduction <add>, %70, %cst_20 [1] : vector<2x128xf32> to vector<2xf32>
    %72 = vector.shape_cast %71 : vector<2xf32> to vector<2x1xf32>
    %73 = tpu.reciprocal %72 : vector<2x1xf32> -> vector<2x1xf32>
    %74 = vector.broadcast %73 : vector<2x1xf32> to vector<2x128xf32>
    %75 = arith.mulf %70, %74 : vector<2x128xf32>
    %76 = arith.subf %75, %34 : vector<2x128xf32>
    %77 = arith.truncf %76 : vector<2x128xf32> to vector<2x128xbf16>
    %cst_21 = arith.constant dense<0.000000e+00> : vector<2x1024xf32>
    %78 = tpu.matmul %77, %1, %cst_21 {dimension_numbers = #tpu.dot_dimension_numbers<[1], [1], [0], [0], [0, 0, 1, 0], [], []>} : vector<2x128xbf16>, vector<1024x128xbf16>, vector<2x1024xf32> -> vector<2x1024xf32>
    %79 = arith.mulf %78, %78 : vector<2x1024xf32>
    %cst_22 = arith.constant dense<0.000000e+00> : vector<2xf32>
    %80 = vector.multi_reduction <add>, %79, %cst_22 [1] : vector<2x1024xf32> to vector<2xf32>
    %81 = vector.shape_cast %80 : vector<2xf32> to vector<2x1xf32>
    %82 = math.sqrt %81 : vector<2x1xf32>
    %cst_23 = arith.constant 9.99999993E-9 : f32
    %83 = vector.broadcast %cst_23 : f32 to vector<2x1xf32>
    %84 = arith.addf %82, %83 : vector<2x1xf32>
    %85 = tpu.reciprocal %84 {approx = true} : vector<2x1xf32> -> vector<2x1xf32>
    %86 = vector.broadcast %85 : vector<2x1xf32> to vector<2x1024xf32>
    %87 = arith.mulf %78, %86 : vector<2x1024xf32>
    %cst_24 = arith.constant 1.000000e+00 : f32
    %88 = vector.broadcast %cst_24 : f32 to vector<2x1024xf32>
    %89 = arith.mulf %88, %87 : vector<2x1024xf32>
    %90 = arith.addf %0, %89 : vector<2x1024xf32>
    %91 = arith.truncf %90 : vector<2x1024xf32> to vector<2x1024xbf16>
    %cst_25 = arith.constant dense<0.000000e+00> : vector<2x128xf32>
    %92 = tpu.matmul %91, %1, %cst_25 {dimension_numbers = #tpu.dot_dimension_numbers<[1], [0], [0], [1], [0, 0, 1, 1], [], []>} : vector<2x1024xbf16>, vector<1024x128xbf16>, vector<2x128xf32> -> vector<2x128xf32>
    %93 = vector.broadcast %2 : vector<1x128xf32> to vector<2x128xf32>
    %94 = arith.addf %92, %93 : vector<2x128xf32>
    %cst_26 = arith.constant -1.000000e+30 : f32
    %95 = vector.shape_cast %5 : vector<1x128xi1> to vector<1x128xi1>
    %96 = vector.broadcast %95 : vector<1x128xi1> to vector<2x128xi1>
    %97 = vector.broadcast %cst_26 : f32 to vector<2x128xf32>
    %98 = arith.select %96, %94, %97 : vector<2x128xi1>, vector<2x128xf32>
    %cst_27 = arith.constant dense<0xFF800000> : vector<2xf32>
    %99 = vector.multi_reduction <maximumf>, %98, %cst_27 [1] : vector<2x128xf32> to vector<2xf32>
    %100 = vector.shape_cast %99 : vector<2xf32> to vector<2x1xf32>
    %101 = vector.broadcast %100 : vector<2x1xf32> to vector<2x128xf32>
    %102 = arith.subf %98, %101 : vector<2x128xf32>
    %103 = math.exp %102 : vector<2x128xf32>
    %cst_28 = arith.constant 0.000000e+00 : f32
    %104 = vector.shape_cast %5 : vector<1x128xi1> to vector<1x128xi1>
    %105 = vector.broadcast %104 : vector<1x128xi1> to vector<2x128xi1>
    %106 = vector.broadcast %cst_28 : f32 to vector<2x128xf32>
    %107 = arith.select %105, %103, %106 : vector<2x128xi1>, vector<2x128xf32>
    %cst_29 = arith.constant dense<0.000000e+00> : vector<2xf32>
    %108 = vector.multi_reduction <add>, %107, %cst_29 [1] : vector<2x128xf32> to vector<2xf32>
    %109 = vector.shape_cast %108 : vector<2xf32> to vector<2x1xf32>
    %110 = math.log %109 : vector<2x1xf32>
    %111 = vector.broadcast %110 : vector<2x1xf32> to vector<2x128xf32>
    %112 = arith.subf %102, %111 : vector<2x128xf32>
    %cst_30 = arith.constant 0.000000e+00 : f32
    %113 = vector.shape_cast %5 : vector<1x128xi1> to vector<1x128xi1>
    %114 = vector.broadcast %113 : vector<1x128xi1> to vector<2x128xi1>
    %115 = vector.broadcast %cst_30 : f32 to vector<2x128xf32>
    %116 = arith.select %114, %112, %115 : vector<2x128xi1>, vector<2x128xf32>
    %117 = arith.mulf %34, %116 : vector<2x128xf32>
    %118 = vector.shape_cast %117 : vector<2x128xf32> to vector<1x2x128xf32>
    %cst_31 = arith.constant dense<0.000000e+00> : vector<1xf32>
    %119 = vector.multi_reduction <add>, %118, %cst_31 [1, 2] : vector<1x2x128xf32> to vector<1xf32>
    %120 = vector.shape_cast %119 : vector<1xf32> to vector<1x1x1xf32>
    %121 = vector.extract %120[0, 0, 0] : f32 from vector<1x1x1xf32>
    %122 = vector.broadcast %121 : f32 to vector<1x1xf32>
    %123 = arith.subf %40, %122 : vector<1x1xf32>
    %cst_32 = arith.constant 5.000000e-01 : f32
    %124 = vector.broadcast %cst_32 : f32 to vector<1x1xf32>
    %125 = arith.mulf %123, %124 : vector<1x1xf32>
    %c0_33 = arith.constant 0 : index
    %c0_34 = arith.constant 0 : index
    %126 = vector.load %arg4[%c0_33, %c0_34] : memref<1x1xf32, #tpu.memory_space<vmem>>, vector<1x1xf32>
    tpu.vector_store %arg4[%c0_33, %c0_34], %125 {strides = array<i32>} : memref<1x1xf32, #tpu.memory_space<vmem>>, vector<1x1xf32>,
    return
  }
}

</mosaic_0001>

<llo_original>
// kernel: tpu_custom_call.1
$region0: #{tpu_custom_call.1}
  #allocation0 [shape = 'u32[]', space=smem, size = 0x4, offset = 0x4, fixed_abs, tag = 'smem constant byte address 0x4 - core index']
  #allocation1 [shape = 'u32[144,128]{1,0:T(1,128)}', space=vmem, size = 0x12000, scoped, tag = 'internal scratch']
  %s0 = inlined_call_operand.hbm [shape: f32[2,1024], index: 0, kind: input, shape index: {}]
  %s1 = inlined_call_operand.hbm [shape: f32[2,1024], index: 1, kind: input, shape index: {}]
  %s2 = inlined_call_operand.hbm [shape: bf16[1024,128], index: 2, kind: input, shape index: {}]
  %s3 = inlined_call_operand.vmem [shape: f32[1,128], index: 3, kind: input, shape index: {}]
  %s4 = inlined_call_operand.hbm [shape: f32[1,1], index: 4, kind: output, shape index: {}]
  %s5 = sld [smem:[#allocation0]]
  $region38: #{tpu_custom_call.1} parent=0
    _
  %s7 = ssub.s32 1, %s5
  %s8 = scalar_select 0, %s7, %s5
  $region1: #{tpu_custom_call.1} parent=0
    #allocation2 [shape = 'u8[8192]{0}', space=vmem, size = 0x2000, scoped, tag = 'input window, operand 0, single buffered']
    #allocation3 [shape = 's32[1]{0}', space=sflag, size = 0x4, scoped, tag = 'scoped memory for tpu_custom_call.1']
    #allocation4 [shape = 's32[1]{0}', space=sflag, size = 0x4, scoped, tag = 'scoped memory for tpu_custom_call.1']
    #allocation5 [shape = 'u8[8192]{0}', space=vmem, size = 0x2000, scoped, tag = 'input window, operand 1, single buffered']
    #allocation6 [shape = 's32[1]{0}', space=sflag, size = 0x4, scoped, tag = 'scoped memory for tpu_custom_call.1']
    #allocation7 [shape = 'u8[262144]{0}', space=vmem, size = 0x40000, scoped, tag = 'input window, operand 2, single buffered']
    #allocation8 [shape = 'u8[512]{0}', space=vmem, size = 0x400, scoped, tag = 'output window, operand 0, single buffered']
    %9 = vsyncpa [#allocation3], 0
    %10 = vsyncpa [#allocation6], 0
    %11 = vsyncpa [#allocation4], 0
    // Predicated region
    $region2: #{tpu_custom_call.1} parent=1 // pred_check
      _
    $region3: #{tpu_custom_call.1} parent=1 // pred_check_branch
      %13 = sbr.rel (0) target = $region5
    $region4: #{tpu_custom_call.1} parent=1 // pred_region
      %s15 = ssub.s32 256, 256
      %16 = vsyncadd [#allocation3], %s15
      %s18 = sshll.u32 [#allocation2], 4
      %s19 = int_to_ptr.vmem [resolvable:$true] %s18
      %21 = dma.hbm_to_vmem [thread:$0]  %s0, 256, %s19, [#allocation3]
    $region5: #{tpu_custom_call.1} parent=1 // pred_fallthru
      _
    // Predicated region
    $region6: #{tpu_custom_call.1} parent=1 // pred_check
      _
    $region7: #{tpu_custom_call.1} parent=1 // pred_check_branch
      %23 = sbr.rel (0) target = $region9
    $region8: #{tpu_custom_call.1} parent=1 // pred_region
      %s25 = ssub.s32 256, 256
      %26 = vsyncadd [#allocation6], %s25
      %s28 = sshll.u32 [#allocation5], 4
      %s29 = int_to_ptr.vmem [resolvable:$true] %s28
      %31 = dma.hbm_to_vmem [thread:$0]  %s1, 256, %s29, [#allocation6]
    $region9: #{tpu_custom_call.1} parent=1 // pred_fallthru
      _
    // Predicated region
    $region10: #{tpu_custom_call.1} parent=1 // pred_check
      _
    $region11: #{tpu_custom_call.1} parent=1 // pred_check_branch
      %33 = sbr.rel (0) target = $region13
    $region12: #{tpu_custom_call.1} parent=1 // pred_region
      %s35 = ssub.s32 8192, 8192
      %36 = vsyncadd [#allocation6], %s35
      %s37 = sshll.u32 [#allocation7], 4
      %s38 = int_to_ptr.vmem [resolvable:$true] %s37
      %43 = dma.hbm_to_vmem [thread:$0]  %s2, 8192, %s38, [#allocation6], 64, 64, 4
    $region13: #{tpu_custom_call.1} parent=1 // pred_fallthru
      _
    // Predicated region
    $region14: #{tpu_custom_call.1} parent=1 // pred_check
      _
    $region15: #{tpu_custom_call.1} parent=1 // pred_check_branch
      %45 = sbr.rel (0) target = $region17
    $region16: #{tpu_custom_call.1} parent=1 // pred_region
      _
    $region17: #{tpu_custom_call.1} parent=1 // pred_fallthru
      _
    // Predicated region
    $region18: #{tpu_custom_call.1} parent=1 // pred_check
      _
    $region19: #{tpu_custom_call.1} parent=1 // pred_check_branch
      %47 = sbr.rel (0) target = $region21
    $region20: #{tpu_custom_call.1} parent=1 // pred_region
      %48 = dma.done [#allocation3], 256
    $region21: #{tpu_custom_call.1} parent=1 // pred_fallthru
      _
    // Predicated region
    $region22: #{tpu_custom_call.1} parent=1 // pred_check
      _
    $region23: #{tpu_custom_call.1} parent=1 // pred_check_branch
      %50 = sbr.rel (0) target = $region25
    $region24: #{tpu_custom_call.1} parent=1 // pred_region
      %51 = dma.done [#allocation6], 256
    $region25: #{tpu_custom_call.1} parent=1 // pred_fallthru
      _
    // Predicated region
    $region26: #{tpu_custom_call.1} parent=1 // pred_check
      _
    $region27: #{tpu_custom_call.1} parent=1 // pred_check_branch
      %53 = sbr.rel (0) target = $region29
    $region28: #{tpu_custom_call.1} parent=1 // pred_region
      %54 = dma.done [#allocation6], 8192
    $region29: #{tpu_custom_call.1} parent=1 // pred_fallthru
      _
    %v56 = vld [vmem:[#allocation2] sm:$0xff]
    %v57 = vld [vmem:[#allocation2 + $0x8] sm:$0xff]
    %v58 = vld [vmem:[#allocation7] sm:$0xf]
    %v59 = vld [vmem:[#allocation7 + $0x4] sm:$0xf]
    %v60 = vld [vmem:[#allocation7 + $0x8] sm:$0xf]
    %v61 = vld [vmem:[#allocation7 + $0xc] sm:$0xf]
    %v62 = vld [vmem:[#allocation7 + $0x10] sm:$0xf]
    %v63 = vld [vmem:[#allocation7 + $0x14] sm:$0xf]
    %v64 = vld [vmem:[#allocation7 + $0x18] sm:$0xf]
    %v65 = vld [vmem:[#allocation7 + $0x1c] sm:$0xf]
    %v66 = vld [vmem:[#allocation7 + $0x20] sm:$0xf]
    %v67 = vld [vmem:[#allocation7 + $0x24] sm:$0xf]
    %v68 = vld [vmem:[#allocation7 + $0x28] sm:$0xf]
    %v69 = vld [vmem:[#allocation7 + $0x2c] sm:$0xf]
    %v70 = vld [vmem:[#allocation7 + $0x30] sm:$0xf]
    %v71 = vld [vmem:[#allocation7 + $0x34] sm:$0xf]
    %v72 = vld [vmem:[#allocation7 + $0x38] sm:$0xf]
    %v73 = vld [vmem:[#allocation7 + $0x3c] sm:$0xf]
    %v74 = vld [vmem:[#allocation7 + $0x40] sm:$0xf]
    %v75 = vld [vmem:[#allocation7 + $0x44] sm:$0xf]
    %v76 = vld [vmem:[#allocation7 + $0x48] sm:$0xf]
    %v77 = vld [vmem:[#allocation7 + $0x4c] sm:$0xf]
    %v78 = vld [vmem:[#allocation7 + $0x50] sm:$0xf]
    %v79 = vld [vmem:[#allocation7 + $0x54] sm:$0xf]
    %v80 = vld [vmem:[#allocation7 + $0x58] sm:$0xf]
    %v81 = vld [vmem:[#allocation7 + $0x5c] sm:$0xf]
    %v82 = vld [vmem:[#allocation7 + $0x60] sm:$0xf]
    %v83 = vld [vmem:[#allocation7 + $0x64] sm:$0xf]
    %v84 = vld [vmem:[#allocation7 + $0x68] sm:$0xf]
    %v85 = vld [vmem:[#allocation7 + $0x6c] sm:$0xf]
    %v86 = vld [vmem:[#allocation7 + $0x70] sm:$0xf]
    %v87 = vld [vmem:[#allocation7 + $0x74] sm:$0xf]
    %v88 = vld [vmem:[#allocation7 + $0x78] sm:$0xf]
    %v89 = vld [vmem:[#allocation7 + $0x7c] sm:$0xf]
    %v90 = vld [vmem:[#allocation7 + $0x80] sm:$0xf]
    %v91 = vld [vmem:[#allocation7 + $0x84] sm:$0xf]
    %v92 = vld [vmem:[#allocation7 + $0x88] sm:$0xf]
    %v93 = vld [vmem:[#allocation7 + $0x8c] sm:$0xf]
    %v94 = vld [vmem:[#allocation7 + $0x90] sm:$0xf]
    %v95 = vld [vmem:[#allocation7 + $0x94] sm:$0xf]
    %v96 = vld [vmem:[#allocation7 + $0x98] sm:$0xf]
    %v97 = vld [vmem:[#allocation7 + $0x9c] sm:$0xf]
    %v98 = vld [vmem:[#allocation7 + $0xa0] sm:$0xf]
    %v99 = vld [vmem:[#allocation7 + $0xa4] sm:$0xf]
    %v100 = vld [vmem:[#allocation7 + $0xa8] sm:$0xf]
    %v101 = vld [vmem:[#allocation7 + $0xac] sm:$0xf]
    %v102 = vld [vmem:[#allocation7 + $0xb0] sm:$0xf]
    %v103 = vld [vmem:[#allocation7 + $0xb4] sm:$0xf]
    %v104 = vld [vmem:[#allocation7 + $0xb8] sm:$0xf]
    %v105 = vld [vmem:[#allocation7 + $0xbc] sm:$0xf]
    %v106 = vld [vmem:[#allocation7 + $0xc0] sm:$0xf]
    %v107 = vld [vmem:[#allocation7 + $0xc4] sm:$0xf]
    %v108 = vld [vmem:[#allocation7 + $0xc8] sm:$0xf]
    %v109 = vld [vmem:[#allocation7 + $0xcc] sm:$0xf]
    %v110 = vld [vmem:[#allocation7 + $0xd0] sm:$0xf]
    %v111 = vld [vmem:[#allocation7 + $0xd4] sm:$0xf]
    %v112 = vld [vmem:[#allocation7 + $0xd8] sm:$0xf]
    %v113 = vld [vmem:[#allocation7 + $0xdc] sm:$0xf]
    %v114 = vld [vmem:[#allocation7 + $0xe0] sm:$0xf]
    %v115 = vld [vmem:[#allocation7 + $0xe4] sm:$0xf]
    %v116 = vld [vmem:[#allocation7 + $0xe8] sm:$0xf]
    %v117 = vld [vmem:[#allocation7 + $0xec] sm:$0xf]
    %v118 = vld [vmem:[#allocation7 + $0xf0] sm:$0xf]
    %v119 = vld [vmem:[#allocation7 + $0xf4] sm:$0xf]
    %v120 = vld [vmem:[#allocation7 + $0xf8] sm:$0xf]
    %v121 = vld [vmem:[#allocation7 + $0xfc] sm:$0xf]
    %v122 = vld [vmem:[#allocation7 + $0x100] sm:$0xf]
    %v123 = vld [vmem:[#allocation7 + $0x104] sm:$0xf]
    %v124 = vld [vmem:[#allocation7 + $0x108] sm:$0xf]
    %v125 = vld [vmem:[#allocation7 + $0x10c] sm:$0xf]
    %v126 = vld [vmem:[#allocation7 + $0x110] sm:$0xf]
    %v127 = vld [vmem:[#allocation7 + $0x114] sm:$0xf]
    %v128 = vld [vmem:[#allocation7 + $0x118] sm:$0xf]
    %v129 = vld [vmem:[#allocation7 + $0x11c] sm:$0xf]
    %v130 = vld [vmem:[#allocation7 + $0x120] sm:$0xf]
    %v131 = vld [vmem:[#allocation7 + $0x124] sm:$0xf]
    %v132 = vld [vmem:[#allocation7 + $0x128] sm:$0xf]
    %v133 = vld [vmem:[#allocation7 + $0x12c] sm:$0xf]
    %v134 = vld [vmem:[#allocation7 + $0x130] sm:$0xf]
    %v135 = vld [vmem:[#allocation7 + $0x134] sm:$0xf]
    %v136 = vld [vmem:[#allocation7 + $0x138] sm:$0xf]
    %v137 = vld [vmem:[#allocation7 + $0x13c] sm:$0xf]
    %v138 = vld [vmem:[#allocation7 + $0x140] sm:$0xf]
    %v139 = vld [vmem:[#allocation7 + $0x144] sm:$0xf]
    %v140 = vld [vmem:[#allocation7 + $0x148] sm:$0xf]
    %v141 = vld [vmem:[#allocation7 + $0x14c] sm:$0xf]
    %v142 = vld [vmem:[#allocation7 + $0x150] sm:$0xf]
    %v143 = vld [vmem:[#allocation7 + $0x154] sm:$0xf]
    %v144 = vld [vmem:[#allocation7 + $0x158] sm:$0xf]
    %v145 = vld [vmem:[#allocation7 + $0x15c] sm:$0xf]
    %v146 = vld [vmem:[#allocation7 + $0x160] sm:$0xf]
    %v147 = vld [vmem:[#allocation7 + $0x164] sm:$0xf]
    %v148 = vld [vmem:[#allocation7 + $0x168] sm:$0xf]
    %v149 = vld [vmem:[#allocation7 + $0x16c] sm:$0xf]
    %v150 = vld [vmem:[#allocation7 + $0x170] sm:$0xf]
    %v151 = vld [vmem:[#allocation7 + $0x174] sm:$0xf]
    %v152 = vld [vmem:[#allocation7 + $0x178] sm:$0xf]
    %v153 = vld [vmem:[#allocation7 + $0x17c] sm:$0xf]
    %v154 = vld [vmem:[#allocation7 + $0x180] sm:$0xf]
    %v155 = vld [vmem:[#allocation7 + $0x184] sm:$0xf]
    %v156 = vld [vmem:[#allocation7 + $0x188] sm:$0xf]
    %v157 = vld [vmem:[#allocation7 + $0x18c] sm:$0xf]
    %v158 = vld [vmem:[#allocation7 + $0x190] sm:$0xf]
    %v159 = vld [vmem:[#allocation7 + $0x194] sm:$0xf]
    %v160 = vld [vmem:[#allocation7 + $0x198] sm:$0xf]
    %v161 = vld [vmem:[#allocation7 + $0x19c] sm:$0xf]
    %v162 = vld [vmem:[#allocation7 + $0x1a0] sm:$0xf]
    %v163 = vld [vmem:[#allocation7 + $0x1a4] sm:$0xf]
    %v164 = vld [vmem:[#allocation7 + $0x1a8] sm:$0xf]
    %v165 = vld [vmem:[#allocation7 + $0x1ac] sm:$0xf]
    %v166 = vld [vmem:[#allocation7 + $0x1b0] sm:$0xf]
    %v167 = vld [vmem:[#allocation7 + $0x1b4] sm:$0xf]
    %v168 = vld [vmem:[#allocation7 + $0x1b8] sm:$0xf]
    %v169 = vld [vmem:[#allocation7 + $0x1bc] sm:$0xf]
    %v170 = vld [vmem:[#allocation7 + $0x1c0] sm:$0xf]
    %v171 = vld [vmem:[#allocation7 + $0x1c4] sm:$0xf]
    %v172 = vld [vmem:[#allocation7 + $0x1c8] sm:$0xf]
    %v173 = vld [vmem:[#allocation7 + $0x1cc] sm:$0xf]
    %v174 = vld [vmem:[#allocation7 + $0x1d0] sm:$0xf]
    %v175 = vld [vmem:[#allocation7 + $0x1d4] sm:$0xf]
    %v176 = vld [vmem:[#allocation7 + $0x1d8] sm:$0xf]
    %v177 = vld [vmem:[#allocation7 + $0x1dc] sm:$0xf]
    %v178 = vld [vmem:[#allocation7 + $0x1e0] sm:$0xf]
    %v179 = vld [vmem:[#allocation7 + $0x1e4] sm:$0xf]
    %v180 = vld [vmem:[#allocation7 + $0x1e8] sm:$0xf]
    %v181 = vld [vmem:[#allocation7 + $0x1ec] sm:$0xf]
    %v182 = vld [vmem:[#allocation7 + $0x1f0] sm:$0xf]
    %v183 = vld [vmem:[#allocation7 + $0x1f4] sm:$0xf]
    %v184 = vld [vmem:[#allocation7 + $0x1f8] sm:$0xf]
    %v185 = vld [vmem:[#allocation7 + $0x1fc] sm:$0xf]
    %v186 = vld [vmem:[%s3] sm:$0x1]
    %v187 = vlaneseq
    %v188 = vand.u32 %v187, 127
    %vm189 = vcmp.lt.s32.totalorder %v188, 10
    %v192 = vcombine.high %v56, %v56
    %v194 = vunpack.c.l.s4 1983009808
    %v195 = vunpack.c.0.s8 %v194
    %v196 = vlaneseq
    %v197 = vshrl.u32 %v196, 7
    %v198 = vsub.s32 %v195, %v197
    %v199 = vrot.slane %v56, %v198
    %v201 = vunpack.c.l.s4 1983009808
    %v202 = vunpack.c.0.s8 %v201
    %v203 = vlaneseq
    %v204 = vshrl.u32 %v203, 7
    %v205 = vsub.s32 %v202, %v204
    %v206 = vrot.slane %v192, %v205
    %v207 = vcombine.high %v199, %v199
    %v208 = vcombine.high %v206, %v206
    %v209 = vcombine.high %v57, %v57
    %v211 = vunpack.c.l.s4 1983009808
    %v212 = vunpack.c.0.s8 %v211
    %v213 = vlaneseq
    %v214 = vshrl.u32 %v213, 7
    %v215 = vsub.s32 %v212, %v214
    %v216 = vrot.slane %v57, %v215
    %v218 = vunpack.c.l.s4 1983009808
    %v219 = vunpack.c.0.s8 %v218
    %v220 = vlaneseq
    %v221 = vshrl.u32 %v220, 7
    %v222 = vsub.s32 %v219, %v221
    %v223 = vrot.slane %v209, %v222
    %v224 = vcombine.high %v216, %v216
    %v225 = vcombine.high %v223, %v223
    %v234 = vpack.c.bf16 %v199, %v199
    %v235 = vpack.c.bf16 %v207, %v207
    %v236 = vpack.c.bf16 %v206, %v206
    %v237 = vpack.c.bf16 %v208, %v208
    %v238 = vpack.c.bf16 %v216, %v216
    %v239 = vpack.c.bf16 %v224, %v224
    %v240 = vpack.c.bf16 %v223, %v223
    %v241 = vpack.c.bf16 %v225, %v225
    %v243 = vlaneseq
    %v244 = vshrl.u32 %v243, 7
    %v245 = vsub.s32 0, %v244
    %v246 = vrot.slane %v186, %v245
    %v376 = vunpack.c.l.b16 %v58
    %v377 = vunpack.c.l.b16 %v59
    %v378 = vunpack.c.l.b16 %v60
    %v379 = vunpack.c.l.b16 %v61
    %v380 = vunpack.c.l.b16 %v62
    %v381 = vunpack.c.l.b16 %v63
    %v382 = vunpack.c.l.b16 %v64
    %v383 = vunpack.c.l.b16 %v65
    %v384 = vunpack.c.l.b16 %v66
    %v385 = vunpack.c.l.b16 %v67
    %v386 = vunpack.c.l.b16 %v68
    %v387 = vunpack.c.l.b16 %v69
    %v388 = vunpack.c.l.b16 %v70
    %v389 = vunpack.c.l.b16 %v71
    %v390 = vunpack.c.l.b16 %v72
    %v391 = vunpack.c.l.b16 %v73
    %v392 = vunpack.c.l.b16 %v74
    %v393 = vunpack.c.l.b16 %v75
    %v394 = vunpack.c.l.b16 %v76
    %v395 = vunpack.c.l.b16 %v77
    %v396 = vunpack.c.l.b16 %v78
    %v397 = vunpack.c.l.b16 %v79
    %v398 = vunpack.c.l.b16 %v80
    %v399 = vunpack.c.l.b16 %v81
    %v400 = vunpack.c.l.b16 %v82
    %v401 = vunpack.c.l.b16 %v83
    %v402 = vunpack.c.l.b16 %v84
    %v403 = vunpack.c.l.b16 %v85
    %v404 = vunpack.c.l.b16 %v86
    %v405 = vunpack.c.l.b16 %v87
    %v406 = vunpack.c.l.b16 %v88
    %v407 = vunpack.c.l.b16 %v89
    %v408 = vunpack.c.l.b16 %v90
    %v409 = vunpack.c.l.b16 %v91
    %v410 = vunpack.c.l.b16 %v92
    %v411 = vunpack.c.l.b16 %v93
    %v412 = vunpack.c.l.b16 %v94
    %v413 = vunpack.c.l.b16 %v95
    %v414 = vunpack.c.l.b16 %v96
    %v415 = vunpack.c.l.b16 %v97
    %v416 = vunpack.c.l.b16 %v98
    %v417 = vunpack.c.l.b16 %v99
    %v418 = vunpack.c.l.b16 %v100
    %v419 = vunpack.c.l.b16 %v101
    %v420 = vunpack.c.l.b16 %v102
    %v421 = vunpack.c.l.b16 %v103
    %v422 = vunpack.c.l.b16 %v104
    %v423 = vunpack.c.l.b16 %v105
    %v424 = vunpack.c.l.b16 %v106
    %v425 = vunpack.c.l.b16 %v107
    %v426 = vunpack.c.l.b16 %v108
    %v427 = vunpack.c.l.b16 %v109
    %v428 = vunpack.c.l.b16 %v110
    %v429 = vunpack.c.l.b16 %v111
    %v430 = vunpack.c.l.b16 %v112
    %v431 = vunpack.c.l.b16 %v113
    %v432 = vunpack.c.l.b16 %v114
    %v433 = vunpack.c.l.b16 %v115
    %v434 = vunpack.c.l.b16 %v116
    %v435 = vunpack.c.l.b16 %v117
    %v436 = vunpack.c.l.b16 %v118
    %v437 = vunpack.c.l.b16 %v119
    %v438 = vunpack.c.l.b16 %v120
    %v439 = vunpack.c.l.b16 %v121
    %v440 = vunpack.c.l.b16 %v122
    %v441 = vunpack.c.l.b16 %v123
    %v442 = vunpack.c.l.b16 %v124
    %v443 = vunpack.c.l.b16 %v125
    %v444 = vunpack.c.l.b16 %v126
    %v445 = vunpack.c.l.b16 %v127
    %v446 = vunpack.c.l.b16 %v128
    %v447 = vunpack.c.l.b16 %v129
    %v448 = vunpack.c.l.b16 %v130
    %v449 = vunpack.c.l.b16 %v131
    %v450 = vunpack.c.l.b16 %v132
    %v451 = vunpack.c.l.b16 %v133
    %v452 = vunpack.c.l.b16 %v134
    %v453 = vunpack.c.l.b16 %v135
    %v454 = vunpack.c.l.b16 %v136
    %v455 = vunpack.c.l.b16 %v137
    %v456 = vunpack.c.l.b16 %v138
    %v457 = vunpack.c.l.b16 %v139
    %v458 = vunpack.c.l.b16 %v140
    %v459 = vunpack.c.l.b16 %v141
    %v460 = vunpack.c.l.b16 %v142
    %v461 = vunpack.c.l.b16 %v143
    %v462 = vunpack.c.l.b16 %v144
    %v463 = vunpack.c.l.b16 %v145
    %v464 = vunpack.c.l.b16 %v146
    %v465 = vunpack.c.l.b16 %v147
    %v466 = vunpack.c.l.b16 %v148
    %v467 = vunpack.c.l.b16 %v149
    %v468 = vunpack.c.l.b16 %v150
    %v469 = vunpack.c.l.b16 %v151
    %v470 = vunpack.c.l.b16 %v152
    %v471 = vunpack.c.l.b16 %v153
    %v472 = vunpack.c.l.b16 %v154
    %v473 = vunpack.c.l.b16 %v155
    %v474 = vunpack.c.l.b16 %v156
    %v475 = vunpack.c.l.b16 %v157
    %v476 = vunpack.c.l.b16 %v158
    %v477 = vunpack.c.l.b16 %v159
    %v478 = vunpack.c.l.b16 %v160
    %v479 = vunpack.c.l.b16 %v161
    %v480 = vunpack.c.l.b16 %v162
    %v481 = vunpack.c.l.b16 %v163
    %v482 = vunpack.c.l.b16 %v164
    %v483 = vunpack.c.l.b16 %v165
    %v484 = vunpack.c.l.b16 %v166
    %v485 = vunpack.c.l.b16 %v167
    %v486 = vunpack.c.l.b16 %v168
    %v487 = vunpack.c.l.b16 %v169
    %v488 = vunpack.c.l.b16 %v170
    %v489 = vunpack.c.l.b16 %v171
    %v490 = vunpack.c.l.b16 %v172
    %v491 = vunpack.c.l.b16 %v173
    %v492 = vunpack.c.l.b16 %v174
    %v493 = vunpack.c.l.b16 %v175
    %v494 = vunpack.c.l.b16 %v176
    %v495 = vunpack.c.l.b16 %v177
    %v496 = vunpack.c.l.b16 %v178
    %v497 = vunpack.c.l.b16 %v179
    %v498 = vunpack.c.l.b16 %v180
    %v499 = vunpack.c.l.b16 %v181
    %v500 = vunpack.c.l.b16 %v182
    %v501 = vunpack.c.l.b16 %v183
    %v502 = vunpack.c.l.b16 %v184
    %v503 = vunpack.c.l.b16 %v185
    %v504 = vpack.c.b16 %v377, %v376
    %v505 = vpack.c.b16 %v379, %v378
    %v506 = vpack.c.b16 %v381, %v380
    %v507 = vpack.c.b16 %v383, %v382
    %v508 = vpack.c.b16 %v385, %v384
    %v509 = vpack.c.b16 %v387, %v386
    %v510 = vpack.c.b16 %v389, %v388
    %v511 = vpack.c.b16 %v391, %v390
    %v512 = vpack.c.b16 %v393, %v392
    %v513 = vpack.c.b16 %v395, %v394
    %v514 = vpack.c.b16 %v397, %v396
    %v515 = vpack.c.b16 %v399, %v398
    %v516 = vpack.c.b16 %v401, %v400
    %v517 = vpack.c.b16 %v403, %v402
    %v518 = vpack.c.b16 %v405, %v404
    %v519 = vpack.c.b16 %v407, %v406
    %v520 = vpack.c.b16 %v409, %v408
    %v521 = vpack.c.b16 %v411, %v410
    %v522 = vpack.c.b16 %v413, %v412
    %v523 = vpack.c.b16 %v415, %v414
    %v524 = vpack.c.b16 %v417, %v416
    %v525 = vpack.c.b16 %v419, %v418
    %v526 = vpack.c.b16 %v421, %v420
    %v527 = vpack.c.b16 %v423, %v422
    %v528 = vpack.c.b16 %v425, %v424
    %v529 = vpack.c.b16 %v427, %v426
    %v530 = vpack.c.b16 %v429, %v428
    %v531 = vpack.c.b16 %v431, %v430
    %v532 = vpack.c.b16 %v433, %v432
    %v533 = vpack.c.b16 %v435, %v434
    %v534 = vpack.c.b16 %v437, %v436
    %v535 = vpack.c.b16 %v439, %v438
    %v536 = vpack.c.b16 %v441, %v440
    %v537 = vpack.c.b16 %v443, %v442
    %v538 = vpack.c.b16 %v445, %v444
    %v539 = vpack.c.b16 %v447, %v446
    %v540 = vpack.c.b16 %v449, %v448
    %v541 = vpack.c.b16 %v451, %v450
    %v542 = vpack.c.b16 %v453, %v452
    %v543 = vpack.c.b16 %v455, %v454
    %v544 = vpack.c.b16 %v457, %v456
    %v545 = vpack.c.b16 %v459, %v458
    %v546 = vpack.c.b16 %v461, %v460
    %v547 = vpack.c.b16 %v463, %v462
    %v548 = vpack.c.b16 %v465, %v464
    %v549 = vpack.c.b16 %v467, %v466
    %v550 = vpack.c.b16 %v469, %v468
    %v551 = vpack.c.b16 %v471, %v470
    %v552 = vpack.c.b16 %v473, %v472
    %v553 = vpack.c.b16 %v475, %v474
    %v554 = vpack.c.b16 %v477, %v476
    %v555 = vpack.c.b16 %v479, %v478
    %v556 = vpack.c.b16 %v481, %v480
    %v557 = vpack.c.b16 %v483, %v482
    %v558 = vpack.c.b16 %v485, %v484
    %v559 = vpack.c.b16 %v487, %v486
    %v560 = vpack.c.b16 %v489, %v488
    %v561 = vpack.c.b16 %v491, %v490
    %v562 = vpack.c.b16 %v493, %v492
    %v563 = vpack.c.b16 %v495, %v494
    %v564 = vpack.c.b16 %v497, %v496
    %v565 = vpack.c.b16 %v499, %v498
    %v566 = vpack.c.b16 %v501, %v500
    %v567 = vpack.c.b16 %v503, %v502
    %632 = vmatprep.subr.bf16.mxu0 0
    %633 = vmatpush1.bf16.msra.mxu0 %v504
    %634 = vmatprep.subr.bf16.mxu0 0
    %635 = vmatpush1.bf16.msra.mxu0 %v505
    %636 = vmatprep.subr.bf16.mxu0 0
    %637 = vmatpush1.bf16.msra.mxu0 %v506
    %638 = vmatprep.subr.bf16.mxu0 0
    %639 = vmatpush1.bf16.msra.mxu0 %v507
    %640 = vmatprep.subr.bf16.mxu0 0
    %641 = vmatpush1.bf16.msra.mxu0 %v508
    %642 = vmatprep.subr.bf16.mxu0 0
    %643 = vmatpush1.bf16.msra.mxu0 %v509
    %644 = vmatprep.subr.bf16.mxu0 0
    %645 = vmatpush1.bf16.msra.mxu0 %v510
    %646 = vmatprep.subr.bf16.mxu0 0
    %647 = vmatpush1.bf16.msra.mxu0 %v511
    %648 = vmatprep.subr.bf16.mxu0 0
    %649 = vmatpush1.bf16.msra.mxu0 %v512
    %650 = vmatprep.subr.bf16.mxu0 0
    %651 = vmatpush1.bf16.msra.mxu0 %v513
    %652 = vmatprep.subr.bf16.mxu0 0
    %653 = vmatpush1.bf16.msra.mxu0 %v514
    %654 = vmatprep.subr.bf16.mxu0 0
    %655 = vmatpush1.bf16.msra.mxu0 %v515
    %656 = vmatprep.subr.bf16.mxu0 0
    %657 = vmatpush1.bf16.msra.mxu0 %v516
    %658 = vmatprep.subr.bf16.mxu0 0
    %659 = vmatpush1.bf16.msra.mxu0 %v517
    %660 = vmatprep.subr.bf16.mxu0 0
    %661 = vmatpush1.bf16.msra.mxu0 %v518
    %662 = vmatprep.subr.bf16.mxu0 0
    %663 = vmatpush1.bf16.msra.mxu0 %v519
    %664 = vmatprep.mubr.bf16.mxu0 %v235
    %665 = vmatmul.mubr.bf16.gmra.mrb[0].mxu0 %v234
    %v666 = vpop.f32.mrb[0].mxu0
    %v667 = vadd.f32 %v246, %v666
    %v668 = vpop.f32.mrb[0].mxu0
    %v669 = vpop.f32.mrb[0].mxu0
    %v670 = vpop.f32.mrb[0].mxu0
    %671 = vdwg.mxu0
    %672 = vmatprep.subr.bf16.mxu0 0
    %673 = vmatpush1.bf16.msra.mxu0 %v520
    %674 = vmatprep.subr.bf16.mxu0 0
    %675 = vmatpush1.bf16.msra.mxu0 %v521
    %676 = vmatprep.subr.bf16.mxu0 0
    %677 = vmatpush1.bf16.msra.mxu0 %v522
    %678 = vmatprep.subr.bf16.mxu0 0
    %679 = vmatpush1.bf16.msra.mxu0 %v523
    %680 = vmatprep.subr.bf16.mxu0 0
    %681 = vmatpush1.bf16.msra.mxu0 %v524
    %682 = vmatprep.subr.bf16.mxu0 0
    %683 = vmatpush1.bf16.msra.mxu0 %v525
    %684 = vmatprep.subr.bf16.mxu0 0
    %685 = vmatpush1.bf16.msra.mxu0 %v526
    %686 = vmatprep.subr.bf16.mxu0 0
    %687 = vmatpush1.bf16.msra.mxu0 %v527
    %688 = vmatprep.subr.bf16.mxu0 0
    %689 = vmatpush1.bf16.msra.mxu0 %v528
    %690 = vmatprep.subr.bf16.mxu0 0
    %691 = vmatpush1.bf16.msra.mxu0 %v529
    %692 = vmatprep.subr.bf16.mxu0 0
    %693 = vmatpush1.bf16.msra.mxu0 %v530
    %694 = vmatprep.subr.bf16.mxu0 0
    %695 = vmatpush1.bf16.msra.mxu0 %v531
    %696 = vmatprep.subr.bf16.mxu0 0
    %697 = vmatpush1.bf16.msra.mxu0 %v532
    %698 = vmatprep.subr.bf16.mxu0 0
    %699 = vmatpush1.bf16.msra.mxu0 %v533
    %700 = vmatprep.subr.bf16.mxu0 0
    %701 = vmatpush1.bf16.msra.mxu0 %v534
    %702 = vmatprep.subr.bf16.mxu0 0
    %703 = vmatpush1.bf16.msra.mxu0 %v535
    %704 = vmatprep.mubr.bf16.mxu0 %v237
    %705 = vmatmul.mubr.bf16.gmra.mrb[0].mxu0 %v236
    %v706 = vpop.f32.mrb[0].mxu0
    %v707 = vadd.f32 %v667, %v706
    %v708 = vpop.f32.mrb[0].mxu0
    %v709 = vpop.f32.mrb[0].mxu0
    %v710 = vpop.f32.mrb[0].mxu0
    %711 = vdwg.mxu0
    %712 = vmatprep.subr.bf16.mxu0 0
    %713 = vmatpush1.bf16.msra.mxu0 %v536
    %714 = vmatprep.subr.bf16.mxu0 0
    %715 = vmatpush1.bf16.msra.mxu0 %v537
    %716 = vmatprep.subr.bf16.mxu0 0
    %717 = vmatpush1.bf16.msra.mxu0 %v538
    %718 = vmatprep.subr.bf16.mxu0 0
    %719 = vmatpush1.bf16.msra.mxu0 %v539
    %720 = vmatprep.subr.bf16.mxu0 0
    %721 = vmatpush1.bf16.msra.mxu0 %v540
    %722 = vmatprep.subr.bf16.mxu0 0
    %723 = vmatpush1.bf16.msra.mxu0 %v541
    %724 = vmatprep.subr.bf16.mxu0 0
    %725 = vmatpush1.bf16.msra.mxu0 %v542
    %726 = vmatprep.subr.bf16.mxu0 0
    %727 = vmatpush1.bf16.msra.mxu0 %v543
    %728 = vmatprep.subr.bf16.mxu0 0
    %729 = vmatpush1.bf16.msra.mxu0 %v544
    %730 = vmatprep.subr.bf16.mxu0 0
    %731 = vmatpush1.bf16.msra.mxu0 %v545
    %732 = vmatprep.subr.bf16.mxu0 0
    %733 = vmatpush1.bf16.msra.mxu0 %v546
    %734 = vmatprep.subr.bf16.mxu0 0
    %735 = vmatpush1.bf16.msra.mxu0 %v547
    %736 = vmatprep.subr.bf16.mxu0 0
    %737 = vmatpush1.bf16.msra.mxu0 %v548
    %738 = vmatprep.subr.bf16.mxu0 0
    %739 = vmatpush1.bf16.msra.mxu0 %v549
    %740 = vmatprep.subr.bf16.mxu0 0
    %741 = vmatpush1.bf16.msra.mxu0 %v550
    %742 = vmatprep.subr.bf16.mxu0 0
    %743 = vmatpush1.bf16.msra.mxu0 %v551
    %744 = vmatprep.mubr.bf16.mxu0 %v239
    %745 = vmatmul.mubr.bf16.gmra.mrb[0].mxu0 %v238
    %v746 = vpop.f32.mrb[0].mxu0
    %v747 = vadd.f32 %v707, %v746
    %v748 = vpop.f32.mrb[0].mxu0
    %v749 = vpop.f32.mrb[0].mxu0
    %v750 = vpop.f32.mrb[0].mxu0
    %751 = vdwg.mxu0
    %752 = vmatprep.subr.bf16.mxu0 0
    %753 = vmatpush1.bf16.msra.mxu0 %v552
    %754 = vmatprep.subr.bf16.mxu0 0
    %755 = vmatpush1.bf16.msra.mxu0 %v553
    %756 = vmatprep.subr.bf16.mxu0 0
    %757 = vmatpush1.bf16.msra.mxu0 %v554
    %758 = vmatprep.subr.bf16.mxu0 0
    %759 = vmatpush1.bf16.msra.mxu0 %v555
    %760 = vmatprep.subr.bf16.mxu0 0
    %761 = vmatpush1.bf16.msra.mxu0 %v556
    %762 = vmatprep.subr.bf16.mxu0 0
    %763 = vmatpush1.bf16.msra.mxu0 %v557
    %764 = vmatprep.subr.bf16.mxu0 0
    %765 = vmatpush1.bf16.msra.mxu0 %v558
    %766 = vmatprep.subr.bf16.mxu0 0
    %767 = vmatpush1.bf16.msra.mxu0 %v559
    %768 = vmatprep.subr.bf16.mxu0 0
    %769 = vmatpush1.bf16.msra.mxu0 %v560
    %770 = vmatprep.subr.bf16.mxu0 0
    %771 = vmatpush1.bf16.msra.mxu0 %v561
    %772 = vmatprep.subr.bf16.mxu0 0
    %773 = vmatpush1.bf16.msra.mxu0 %v562
    %774 = vmatprep.subr.bf16.mxu0 0
    %775 = vmatpush1.bf16.msra.mxu0 %v563
    %776 = vmatprep.subr.bf16.mxu0 0
    %777 = vmatpush1.bf16.msra.mxu0 %v564
    %778 = vmatprep.subr.bf16.mxu0 0
    %779 = vmatpush1.bf16.msra.mxu0 %v565
    %780 = vmatprep.subr.bf16.mxu0 0
    %781 = vmatpush1.bf16.msra.mxu0 %v566
    %782 = vmatprep.subr.bf16.mxu0 0
    %783 = vmatpush1.bf16.msra.mxu0 %v567
    %784 = vmatprep.mubr.bf16.mxu0 %v241
    %785 = vmatmul.mubr.bf16.gmra.mrb[0].mxu0 %v240
    %v786 = vpop.f32.mrb[0].mxu0
    %v787 = vadd.f32 %v747, %v786
    %v788 = vpop.f32.mrb[0].mxu0
    %v789 = vpop.f32.mrb[0].mxu0
    %v790 = vpop.f32.mrb[0].mxu0
    %791 = vdwg.mxu0
    %v792 = vsel %vm189, 1, 0
    %vm793 = vcmp.eq.s32.totalorder %v792, 1
    %v794 = vsel %vm793, %v787, -1e+30
    %vm795 = vcmask 1041408
    %v796 = vsel %vm795, %v794, -inf
    %797 = vmax.xlane.f32.xlu0 %v796
    %v798 = vpop.xlane.xlu0 %797
    %v799 = vsub.f32 %v794, %v798
    %v800 = vmul.f32 %v799, 1.442695
    %v801 = vpow.pop %v800
    %v802 = vsel %vm793, %v801, 0.0
    %v803 = vsel %vm795, %v802, 0.0
    %804 = vadd.xlane.f32.xlu0 %v803
    %v805 = vpop.xlane.xlu0 %804
    %v806 = vlog2.pop %v805
    %v807 = vmul.f32 %v806, 0.6931472
    %v808 = vsub.f32 %v799, %v807
    %v809 = vsel %vm793, %v808, 0.0
    %v810 = vrcp.pop %v805
    %v811 = vmul.f32 %v802, %v810
    %v812 = vmul.f32 %v811, %v809
    %v813 = vsel %vm795, %v812, 0.0
    %814 = vadd.xlane.f32.xlu0 %v813
    %v815 = vpop.xlane.xlu0 %814
    %v816 = vrot.slane %v815, 4
    %v817 = vadd.f32 %v815, %v816
    %v818 = vrot.slane %v817, 2
    %v819 = vadd.f32 %v817, %v818
    %v820 = vrot.slane %v819, 1
    %v821 = vadd.f32 %v819, %v820
    %s822 = vtos %v821
    %v823 = vstv %s822
    %v824 = vld [vmem:[#allocation5] sm:$0xff]
    %v825 = vld [vmem:[#allocation5 + $0x8] sm:$0xff]
    %v826 = vmul.f32 %v824, %v824
    %v827 = vmul.f32 %v825, %v825
    %v830 = vcombine.high %v826, %v826
    %v832 = vunpack.c.l.s4 1983009808
    %v833 = vunpack.c.0.s8 %v832
    %v834 = vlaneseq
    %v835 = vshrl.u32 %v834, 7
    %v836 = vsub.s32 %v833, %v835
    %v837 = vrot.slane %v826, %v836
    %v839 = vunpack.c.l.s4 1983009808
    %v840 = vunpack.c.0.s8 %v839
    %v841 = vlaneseq
    %v842 = vshrl.u32 %v841, 7
    %v843 = vsub.s32 %v840, %v842
    %v844 = vrot.slane %v830, %v843
    %v845 = vcombine.high %v837, %v837
    %v846 = vcombine.high %v844, %v844
    %v847 = vcombine.high %v827, %v827
    %v849 = vunpack.c.l.s4 1983009808
    %v850 = vunpack.c.0.s8 %v849
    %v851 = vlaneseq
    %v852 = vshrl.u32 %v851, 7
    %v853 = vsub.s32 %v850, %v852
    %v854 = vrot.slane %v827, %v853
    %v856 = vunpack.c.l.s4 1983009808
    %v857 = vunpack.c.0.s8 %v856
    %v858 = vlaneseq
    %v859 = vshrl.u32 %v858, 7
    %v860 = vsub.s32 %v857, %v859
    %v861 = vrot.slane %v847, %v860
    %v862 = vcombine.high %v854, %v854
    %v863 = vcombine.high %v861, %v861
    %v872 = vsel %vm795, %v837, 0.0
    %v873 = vsel %vm795, %v845, 0.0
    %v874 = vadd.f32 %v872, %v873
    %v875 = vsel %vm795, %v844, 0.0
    %v876 = vadd.f32 %v874, %v875
    %v877 = vsel %vm795, %v846, 0.0
    %v878 = vadd.f32 %v876, %v877
    %v879 = vsel %vm795, %v854, 0.0
    %v880 = vadd.f32 %v878, %v879
    %v881 = vsel %vm795, %v862, 0.0
    %v882 = vadd.f32 %v880, %v881
    %v883 = vsel %vm795, %v861, 0.0
    %v884 = vadd.f32 %v882, %v883
    %v885 = vsel %vm795, %v863, 0.0
    %v886 = vadd.f32 %v884, %v885
    %887 = vadd.xlane.f32.xlu0 %v886
    %v888 = vpop.xlane.xlu0 %887
    %v889 = vrsqrt.pop %v888
    %v890 = vmul.f32 %v888, %v889
    %vm891 = vcmp.eq.f32.partialorder %v888, inf
    %v892 = vsel %vm891, %v888, %v890
    %vm893 = vcmp.eq.f32.partialorder %v888, 0.0
    %v894 = vand.u32 %v888, 2147483648
    %v895 = vsel %vm893, %v894, %v892
    %v896 = vadd.f32 %v895, 1e-08
    %v897 = vrcp.pop %v896
    %v900 = vunpack.c.l.s4 269488144
    %v901 = vunpack.c.0.s8 %v900
    %v902 = vlaneseq
    %v903 = vshrl.u32 %v902, 7
    %v904 = vsub.s32 %v901, %v903
    %v905 = vrot.slane %v897, %v904
    %v907 = vmul.f32 %v824, %v905
    %v908 = vmul.f32 %v825, %v905
    %v909 = vmul.f32 %v907, 0.1
    %v910 = vmul.f32 %v908, 0.1
    %v911 = vadd.f32 %v56, %v909
    %v912 = vadd.f32 %v57, %v910
    %v915 = vcombine.high %v911, %v911
    %v917 = vunpack.c.l.s4 1983009808
    %v918 = vunpack.c.0.s8 %v917
    %v919 = vlaneseq
    %v920 = vshrl.u32 %v919, 7
    %v921 = vsub.s32 %v918, %v920
    %v922 = vrot.slane %v911, %v921
    %v924 = vunpack.c.l.s4 1983009808
    %v925 = vunpack.c.0.s8 %v924
    %v926 = vlaneseq
    %v927 = vshrl.u32 %v926, 7
    %v928 = vsub.s32 %v925, %v927
    %v929 = vrot.slane %v915, %v928
    %v930 = vcombine.high %v922, %v922
    %v931 = vcombine.high %v929, %v929
    %v932 = vcombine.high %v912, %v912
    %v934 = vunpack.c.l.s4 1983009808
    %v935 = vunpack.c.0.s8 %v934
    %v936 = vlaneseq
    %v937 = vshrl.u32 %v936, 7
    %v938 = vsub.s32 %v935, %v937
    %v939 = vrot.slane %v912, %v938
    %v941 = vunpack.c.l.s4 1983009808
    %v942 = vunpack.c.0.s8 %v941
    %v943 = vlaneseq
    %v944 = vshrl.u32 %v943, 7
    %v945 = vsub.s32 %v942, %v944
    %v946 = vrot.slane %v932, %v945
    %v947 = vcombine.high %v939, %v939
    %v948 = vcombine.high %v946, %v946
    %v957 = vpack.c.bf16 %v922, %v922
    %v958 = vpack.c.bf16 %v930, %v930
    %v959 = vpack.c.bf16 %v929, %v929
    %v960 = vpack.c.bf16 %v931, %v931
    %v961 = vpack.c.bf16 %v939, %v939
    %v962 = vpack.c.bf16 %v947, %v947
    %v963 = vpack.c.bf16 %v946, %v946
    %v964 = vpack.c.bf16 %v948, %v948
    %965 = vmatprep.subr.bf16.mxu0 0
    %966 = vmatpush1.bf16.msra.mxu0 %v504
    %967 = vmatprep.subr.bf16.mxu0 0
    %968 = vmatpush1.bf16.msra.mxu0 %v505
    %969 = vmatprep.subr.bf16.mxu0 0
    %970 = vmatpush1.bf16.msra.mxu0 %v506
    %971 = vmatprep.subr.bf16.mxu0 0
    %972 = vmatpush1.bf16.msra.mxu0 %v507
    %973 = vmatprep.subr.bf16.mxu0 0
    %974 = vmatpush1.bf16.msra.mxu0 %v508
    %975 = vmatprep.subr.bf16.mxu0 0
    %976 = vmatpush1.bf16.msra.mxu0 %v509
    %977 = vmatprep.subr.bf16.mxu0 0
    %978 = vmatpush1.bf16.msra.mxu0 %v510
    %979 = vmatprep.subr.bf16.mxu0 0
    %980 = vmatpush1.bf16.msra.mxu0 %v511
    %981 = vmatprep.subr.bf16.mxu0 0
    %982 = vmatpush1.bf16.msra.mxu0 %v512
    %983 = vmatprep.subr.bf16.mxu0 0
    %984 = vmatpush1.bf16.msra.mxu0 %v513
    %985 = vmatprep.subr.bf16.mxu0 0
    %986 = vmatpush1.bf16.msra.mxu0 %v514
    %987 = vmatprep.subr.bf16.mxu0 0
    %988 = vmatpush1.bf16.msra.mxu0 %v515
    %989 = vmatprep.subr.bf16.mxu0 0
    %990 = vmatpush1.bf16.msra.mxu0 %v516
    %991 = vmatprep.subr.bf16.mxu0 0
    %992 = vmatpush1.bf16.msra.mxu0 %v517
    %993 = vmatprep.subr.bf16.mxu0 0
    %994 = vmatpush1.bf16.msra.mxu0 %v518
    %995 = vmatprep.subr.bf16.mxu0 0
    %996 = vmatpush1.bf16.msra.mxu0 %v519
    %997 = vmatprep.mubr.bf16.mxu0 %v958
    %998 = vmatmul.mubr.bf16.gmra.mrb[0].mxu0 %v957
    %v999 = vpop.f32.mrb[0].mxu0
    %v1000 = vadd.f32 %v246, %v999
    %v1001 = vpop.f32.mrb[0].mxu0
    %v1002 = vpop.f32.mrb[0].mxu0
    %v1003 = vpop.f32.mrb[0].mxu0
    %1004 = vdwg.mxu0
    %1005 = vmatprep.subr.bf16.mxu0 0
    %1006 = vmatpush1.bf16.msra.mxu0 %v520
    %1007 = vmatprep.subr.bf16.mxu0 0
    %1008 = vmatpush1.bf16.msra.mxu0 %v521
    %1009 = vmatprep.subr.bf16.mxu0 0
    %1010 = vmatpush1.bf16.msra.mxu0 %v522
    %1011 = vmatprep.subr.bf16.mxu0 0
    %1012 = vmatpush1.bf16.msra.mxu0 %v523
    %1013 = vmatprep.subr.bf16.mxu0 0
    %1014 = vmatpush1.bf16.msra.mxu0 %v524
    %1015 = vmatprep.subr.bf16.mxu0 0
    %1016 = vmatpush1.bf16.msra.mxu0 %v525
    %1017 = vmatprep.subr.bf16.mxu0 0
    %1018 = vmatpush1.bf16.msra.mxu0 %v526
    %1019 = vmatprep.subr.bf16.mxu0 0
    %1020 = vmatpush1.bf16.msra.mxu0 %v527
    %1021 = vmatprep.subr.bf16.mxu0 0
    %1022 = vmatpush1.bf16.msra.mxu0 %v528
    %1023 = vmatprep.subr.bf16.mxu0 0
    %1024 = vmatpush1.bf16.msra.mxu0 %v529
    %1025 = vmatprep.subr.bf16.mxu0 0
    %1026 = vmatpush1.bf16.msra.mxu0 %v530
    %1027 = vmatprep.subr.bf16.mxu0 0
    %1028 = vmatpush1.bf16.msra.mxu0 %v531
    %1029 = vmatprep.subr.bf16.mxu0 0
    %1030 = vmatpush1.bf16.msra.mxu0 %v532
    %1031 = vmatprep.subr.bf16.mxu0 0
    %1032 = vmatpush1.bf16.msra.mxu0 %v533
    %1033 = vmatprep.subr.bf16.mxu0 0
    %1034 = vmatpush1.bf16.msra.mxu0 %v534
    %1035 = vmatprep.subr.bf16.mxu0 0
    %1036 = vmatpush1.bf16.msra.mxu0 %v535
    %1037 = vmatprep.mubr.bf16.mxu0 %v960
    %1038 = vmatmul.mubr.bf16.gmra.mrb[0].mxu0 %v959
    %v1039 = vpop.f32.mrb[0].mxu0
    %v1040 = vadd.f32 %v1000, %v1039
    %v1041 = vpop.f32.mrb[0].mxu0
    %v1042 = vpop.f32.mrb[0].mxu0
    %v1043 = vpop.f32.mrb[0].mxu0
    %1044 = vdwg.mxu0
    %1045 = vmatprep.subr.bf16.mxu0 0
    %1046 = vmatpush1.bf16.msra.mxu0 %v536
    %1047 = vmatprep.subr.bf16.mxu0 0
    %1048 = vmatpush1.bf16.msra.mxu0 %v537
    %1049 = vmatprep.subr.bf16.mxu0 0
    %1050 = vmatpush1.bf16.msra.mxu0 %v538
    %1051 = vmatprep.subr.bf16.mxu0 0
    %1052 = vmatpush1.bf16.msra.mxu0 %v539
    %1053 = vmatprep.subr.bf16.mxu0 0
    %1054 = vmatpush1.bf16.msra.mxu0 %v540
    %1055 = vmatprep.subr.bf16.mxu0 0
    %1056 = vmatpush1.bf16.msra.mxu0 %v541
    %1057 = vmatprep.subr.bf16.mxu0 0
    %1058 = vmatpush1.bf16.msra.mxu0 %v542
    %1059 = vmatprep.subr.bf16.mxu0 0
    %1060 = vmatpush1.bf16.msra.mxu0 %v543
    %1061 = vmatprep.subr.bf16.mxu0 0
    %1062 = vmatpush1.bf16.msra.mxu0 %v544
    %1063 = vmatprep.subr.bf16.mxu0 0
    %1064 = vmatpush1.bf16.msra.mxu0 %v545
    %1065 = vmatprep.subr.bf16.mxu0 0
    %1066 = vmatpush1.bf16.msra.mxu0 %v546
    %1067 = vmatprep.subr.bf16.mxu0 0
    %1068 = vmatpush1.bf16.msra.mxu0 %v547
    %1069 = vmatprep.subr.bf16.mxu0 0
    %1070 = vmatpush1.bf16.msra.mxu0 %v548
    %1071 = vmatprep.subr.bf16.mxu0 0
    %1072 = vmatpush1.bf16.msra.mxu0 %v549
    %1073 = vmatprep.subr.bf16.mxu0 0
    %1074 = vmatpush1.bf16.msra.mxu0 %v550
    %1075 = vmatprep.subr.bf16.mxu0 0
    %1076 = vmatpush1.bf16.msra.mxu0 %v551
    %1077 = vmatprep.mubr.bf16.mxu0 %v962
    %1078 = vmatmul.mubr.bf16.gmra.mrb[0].mxu0 %v961
    %v1079 = vpop.f32.mrb[0].mxu0
    %v1080 = vadd.f32 %v1040, %v1079
    %v1081 = vpop.f32.mrb[0].mxu0
    %v1082 = vpop.f32.mrb[0].mxu0
    %v1083 = vpop.f32.mrb[0].mxu0
    %1084 = vdwg.mxu0
    %1085 = vmatprep.subr.bf16.mxu0 0
    %1086 = vmatpush1.bf16.msra.mxu0 %v552
    %1087 = vmatprep.subr.bf16.mxu0 0
    %1088 = vmatpush1.bf16.msra.mxu0 %v553
    %1089 = vmatprep.subr.bf16.mxu0 0
    %1090 = vmatpush1.bf16.msra.mxu0 %v554
    %1091 = vmatprep.subr.bf16.mxu0 0
    %1092 = vmatpush1.bf16.msra.mxu0 %v555
    %1093 = vmatprep.subr.bf16.mxu0 0
    %1094 = vmatpush1.bf16.msra.mxu0 %v556
    %1095 = vmatprep.subr.bf16.mxu0 0
    %1096 = vmatpush1.bf16.msra.mxu0 %v557
    %1097 = vmatprep.subr.bf16.mxu0 0
    %1098 = vmatpush1.bf16.msra.mxu0 %v558
    %1099 = vmatprep.subr.bf16.mxu0 0
    %1100 = vmatpush1.bf16.msra.mxu0 %v559
    %1101 = vmatprep.subr.bf16.mxu0 0
    %1102 = vmatpush1.bf16.msra.mxu0 %v560
    %1103 = vmatprep.subr.bf16.mxu0 0
    %1104 = vmatpush1.bf16.msra.mxu0 %v561
    %1105 = vmatprep.subr.bf16.mxu0 0
    %1106 = vmatpush1.bf16.msra.mxu0 %v562
    %1107 = vmatprep.subr.bf16.mxu0 0
    %1108 = vmatpush1.bf16.msra.mxu0 %v563
    %1109 = vmatprep.subr.bf16.mxu0 0
    %1110 = vmatpush1.bf16.msra.mxu0 %v564
    %1111 = vmatprep.subr.bf16.mxu0 0
    %1112 = vmatpush1.bf16.msra.mxu0 %v565
    %1113 = vmatprep.subr.bf16.mxu0 0
    %1114 = vmatpush1.bf16.msra.mxu0 %v566
    %1115 = vmatprep.subr.bf16.mxu0 0
    %1116 = vmatpush1.bf16.msra.mxu0 %v567
    %1117 = vmatprep.mubr.bf16.mxu0 %v964
    %1118 = vmatmul.mubr.bf16.gmra.mrb[0].mxu0 %v963
    %v1119 = vpop.f32.mrb[0].mxu0
    %v1120 = vadd.f32 %v1080, %v1119
    %v1121 = vpop.f32.mrb[0].mxu0
    %v1122 = vpop.f32.mrb[0].mxu0
    %v1123 = vpop.f32.mrb[0].mxu0
    %1124 = vdwg.mxu0
    %v1125 = vsel %vm793, %v1120, -1e+30
    %v1126 = vsel %vm795, %v1125, -inf
    %1127 = vmax.xlane.f32.xlu0 %v1126
    %v1128 = vpop.xlane.xlu0 %1127
    %v1129 = vsub.f32 %v1125, %v1128
    %v1130 = vmul.f32 %v1129, 1.442695
    %v1131 = vpow.pop %v1130
    %v1132 = vsel %vm793, %v1131, 0.0
    %v1133 = vsel %vm795, %v1132, 0.0
    %1134 = vadd.xlane.f32.xlu0 %v1133
    %v1135 = vpop.xlane.xlu0 %1134
    %v1136 = vrcp.pop %v1135
    %v1137 = vmul.f32 %v1132, %v1136
    %v1138 = vsub.f32 %v1137, %v811
    %v1139 = vpack.c.bf16 %v1138, %v1138
    %1140 = vmatprep.subr.bf16.mxu0 0
    %1141 = vmatpush1.bf16.xpose.msra.mxu0 %v504
    %1142 = vmatprep.subr.bf16.mxu0 0
    %1143 = vmatpush1.bf16.xpose.msra.mxu0 %v505
    %1144 = vmatprep.subr.bf16.mxu0 0
    %1145 = vmatpush1.bf16.xpose.msra.mxu0 %v506
    %1146 = vmatprep.subr.bf16.mxu0 0
    %1147 = vmatpush1.bf16.xpose.msra.mxu0 %v507
    %1148 = vmatprep.subr.bf16.mxu0 0
    %1149 = vmatpush1.bf16.xpose.msra.mxu0 %v508
    %1150 = vmatprep.subr.bf16.mxu0 0
    %1151 = vmatpush1.bf16.xpose.msra.mxu0 %v509
    %1152 = vmatprep.subr.bf16.mxu0 0
    %1153 = vmatpush1.bf16.xpose.msra.mxu0 %v510
    %1154 = vmatprep.subr.bf16.mxu0 0
    %1155 = vmatpush1.bf16.xpose.msra.mxu0 %v511
    %1156 = vmatprep.subr.bf16.mxu0 0
    %1157 = vmatpush1.bf16.xpose.msra.mxu0 %v512
    %1158 = vmatprep.subr.bf16.mxu0 0
    %1159 = vmatpush1.bf16.xpose.msra.mxu0 %v513
    %1160 = vmatprep.subr.bf16.mxu0 0
    %1161 = vmatpush1.bf16.xpose.msra.mxu0 %v514
    %1162 = vmatprep.subr.bf16.mxu0 0
    %1163 = vmatpush1.bf16.xpose.msra.mxu0 %v515
    %1164 = vmatprep.subr.bf16.mxu0 0
    %1165 = vmatpush1.bf16.xpose.msra.mxu0 %v516
    %1166 = vmatprep.subr.bf16.mxu0 0
    %1167 = vmatpush1.bf16.xpose.msra.mxu0 %v517
    %1168 = vmatprep.subr.bf16.mxu0 0
    %1169 = vmatpush1.bf16.xpose.msra.mxu0 %v518
    %1170 = vmatprep.subr.bf16.mxu0 0
    %1171 = vmatpush1.bf16.xpose.msra.mxu0 %v519
    %1172 = vmatprep.mubr.bf16.mxu0 0
    %1173 = vmatmul.mubr.bf16.gmra.mrb[0].mxu0 %v1139
    %v1174 = vpop.f32.mrb[0].mxu0
    %v1175 = vadd.f32 0.0, %v1174
    %v1176 = vpop.f32.mrb[0].mxu0
    %v1177 = vadd.f32 0.0, %v1176
    %v1178 = vpop.f32.mrb[0].mxu0
    %v1179 = vpop.f32.mrb[0].mxu0
    %1180 = vdwg.mxu0
    %1181 = vmatprep.subr.bf16.mxu0 0
    %1182 = vmatpush1.bf16.xpose.msra.mxu0 %v520
    %1183 = vmatprep.subr.bf16.mxu0 0
    %1184 = vmatpush1.bf16.xpose.msra.mxu0 %v521
    %1185 = vmatprep.subr.bf16.mxu0 0
    %1186 = vmatpush1.bf16.xpose.msra.mxu0 %v522
    %1187 = vmatprep.subr.bf16.mxu0 0
    %1188 = vmatpush1.bf16.xpose.msra.mxu0 %v523
    %1189 = vmatprep.subr.bf16.mxu0 0
    %1190 = vmatpush1.bf16.xpose.msra.mxu0 %v524
    %1191 = vmatprep.subr.bf16.mxu0 0
    %1192 = vmatpush1.bf16.xpose.msra.mxu0 %v525
    %1193 = vmatprep.subr.bf16.mxu0 0
    %1194 = vmatpush1.bf16.xpose.msra.mxu0 %v526
    %1195 = vmatprep.subr.bf16.mxu0 0
    %1196 = vmatpush1.bf16.xpose.msra.mxu0 %v527
    %1197 = vmatprep.subr.bf16.mxu0 0
    %1198 = vmatpush1.bf16.xpose.msra.mxu0 %v528
    %1199 = vmatprep.subr.bf16.mxu0 0
    %1200 = vmatpush1.bf16.xpose.msra.mxu0 %v529
    %1201 = vmatprep.subr.bf16.mxu0 0
    %1202 = vmatpush1.bf16.xpose.msra.mxu0 %v530
    %1203 = vmatprep.subr.bf16.mxu0 0
    %1204 = vmatpush1.bf16.xpose.msra.mxu0 %v531
    %1205 = vmatprep.subr.bf16.mxu0 0
    %1206 = vmatpush1.bf16.xpose.msra.mxu0 %v532
    %1207 = vmatprep.subr.bf16.mxu0 0
    %1208 = vmatpush1.bf16.xpose.msra.mxu0 %v533
    %1209 = vmatprep.subr.bf16.mxu0 0
    %1210 = vmatpush1.bf16.xpose.msra.mxu0 %v534
    %1211 = vmatprep.subr.bf16.mxu0 0
    %1212 = vmatpush1.bf16.xpose.msra.mxu0 %v535
    %1213 = vmatprep.mubr.bf16.mxu0 0
    %1214 = vmatmul.mubr.bf16.gmra.mrb[0].mxu0 %v1139
    %v1215 = vpop.f32.mrb[0].mxu0
    %v1216 = vadd.f32 0.0, %v1215
    %v1217 = vpop.f32.mrb[0].mxu0
    %v1218 = vadd.f32 0.0, %v1217
    %v1219 = vpop.f32.mrb[0].mxu0
    %v1220 = vpop.f32.mrb[0].mxu0
    %1221 = vdwg.mxu0
    %1222 = vmatprep.subr.bf16.mxu0 0
    %1223 = vmatpush1.bf16.xpose.msra.mxu0 %v536
    %1224 = vmatprep.subr.bf16.mxu0 0
    %1225 = vmatpush1.bf16.xpose.msra.mxu0 %v537
    %1226 = vmatprep.subr.bf16.mxu0 0
    %1227 = vmatpush1.bf16.xpose.msra.mxu0 %v538
    %1228 = vmatprep.subr.bf16.mxu0 0
    %1229 = vmatpush1.bf16.xpose.msra.mxu0 %v539
    %1230 = vmatprep.subr.bf16.mxu0 0
    %1231 = vmatpush1.bf16.xpose.msra.mxu0 %v540
    %1232 = vmatprep.subr.bf16.mxu0 0
    %1233 = vmatpush1.bf16.xpose.msra.mxu0 %v541
    %1234 = vmatprep.subr.bf16.mxu0 0
    %1235 = vmatpush1.bf16.xpose.msra.mxu0 %v542
    %1236 = vmatprep.subr.bf16.mxu0 0
    %1237 = vmatpush1.bf16.xpose.msra.mxu0 %v543
    %1238 = vmatprep.subr.bf16.mxu0 0
    %1239 = vmatpush1.bf16.xpose.msra.mxu0 %v544
    %1240 = vmatprep.subr.bf16.mxu0 0
    %1241 = vmatpush1.bf16.xpose.msra.mxu0 %v545
    %1242 = vmatprep.subr.bf16.mxu0 0
    %1243 = vmatpush1.bf16.xpose.msra.mxu0 %v546
    %1244 = vmatprep.subr.bf16.mxu0 0
    %1245 = vmatpush1.bf16.xpose.msra.mxu0 %v547
    %1246 = vmatprep.subr.bf16.mxu0 0
    %1247 = vmatpush1.bf16.xpose.msra.mxu0 %v548
    %1248 = vmatprep.subr.bf16.mxu0 0
    %1249 = vmatpush1.bf16.xpose.msra.mxu0 %v549
    %1250 = vmatprep.subr.bf16.mxu0 0
    %1251 = vmatpush1.bf16.xpose.msra.mxu0 %v550
    %1252 = vmatprep.subr.bf16.mxu0 0
    %1253 = vmatpush1.bf16.xpose.msra.mxu0 %v551
    %1254 = vmatprep.mubr.bf16.mxu0 0
    %1255 = vmatmul.mubr.bf16.gmra.mrb[0].mxu0 %v1139
    %v1256 = vpop.f32.mrb[0].mxu0
    %v1257 = vadd.f32 0.0, %v1256
    %v1258 = vpop.f32.mrb[0].mxu0
    %v1259 = vadd.f32 0.0, %v1258
    %v1260 = vpop.f32.mrb[0].mxu0
    %v1261 = vpop.f32.mrb[0].mxu0
    %1262 = vdwg.mxu0
    %1263 = vmatprep.subr.bf16.mxu0 0
    %1264 = vmatpush1.bf16.xpose.msra.mxu0 %v552
    %1265 = vmatprep.subr.bf16.mxu0 0
    %1266 = vmatpush1.bf16.xpose.msra.mxu0 %v553
    %1267 = vmatprep.subr.bf16.mxu0 0
    %1268 = vmatpush1.bf16.xpose.msra.mxu0 %v554
    %1269 = vmatprep.subr.bf16.mxu0 0
    %1270 = vmatpush1.bf16.xpose.msra.mxu0 %v555
    %1271 = vmatprep.subr.bf16.mxu0 0
    %1272 = vmatpush1.bf16.xpose.msra.mxu0 %v556
    %1273 = vmatprep.subr.bf16.mxu0 0
    %1274 = vmatpush1.bf16.xpose.msra.mxu0 %v557
    %1275 = vmatprep.subr.bf16.mxu0 0
    %1276 = vmatpush1.bf16.xpose.msra.mxu0 %v558
    %1277 = vmatprep.subr.bf16.mxu0 0
    %1278 = vmatpush1.bf16.xpose.msra.mxu0 %v559
    %1279 = vmatprep.subr.bf16.mxu0 0
    %1280 = vmatpush1.bf16.xpose.msra.mxu0 %v560
    %1281 = vmatprep.subr.bf16.mxu0 0
    %1282 = vmatpush1.bf16.xpose.msra.mxu0 %v561
    %1283 = vmatprep.subr.bf16.mxu0 0
    %1284 = vmatpush1.bf16.xpose.msra.mxu0 %v562
    %1285 = vmatprep.subr.bf16.mxu0 0
    %1286 = vmatpush1.bf16.xpose.msra.mxu0 %v563
    %1287 = vmatprep.subr.bf16.mxu0 0
    %1288 = vmatpush1.bf16.xpose.msra.mxu0 %v564
    %1289 = vmatprep.subr.bf16.mxu0 0
    %1290 = vmatpush1.bf16.xpose.msra.mxu0 %v565
    %1291 = vmatprep.subr.bf16.mxu0 0
    %1292 = vmatpush1.bf16.xpose.msra.mxu0 %v566
    %1293 = vmatprep.subr.bf16.mxu0 0
    %1294 = vmatpush1.bf16.xpose.msra.mxu0 %v567
    %1295 = vmatprep.mubr.bf16.mxu0 0
    %1296 = vmatmul.mubr.bf16.gmra.mrb[0].mxu0 %v1139
    %v1297 = vpop.f32.mrb[0].mxu0
    %v1298 = vadd.f32 0.0, %v1297
    %v1299 = vpop.f32.mrb[0].mxu0
    %v1300 = vadd.f32 0.0, %v1299
    %v1301 = vpop.f32.mrb[0].mxu0
    %v1302 = vpop.f32.mrb[0].mxu0
    %1303 = vdwg.mxu0
    %v1304 = vmul.f32 %v1175, %v1175
    %v1305 = vmul.f32 %v1177, %v1177
    %v1306 = vmul.f32 %v1216, %v1216
    %v1307 = vmul.f32 %v1218, %v1218
    %v1308 = vmul.f32 %v1257, %v1257
    %v1309 = vmul.f32 %v1259, %v1259
    %v1310 = vmul.f32 %v1298, %v1298
    %v1311 = vmul.f32 %v1300, %v1300
    %v1312 = vsel %vm795, %v1304, 0.0
    %v1313 = vsel %vm795, %v1305, 0.0
    %v1314 = vadd.f32 %v1312, %v1313
    %v1315 = vsel %vm795, %v1306, 0.0
    %v1316 = vadd.f32 %v1314, %v1315
    %v1317 = vsel %vm795, %v1307, 0.0
    %v1318 = vadd.f32 %v1316, %v1317
    %v1319 = vsel %vm795, %v1308, 0.0
    %v1320 = vadd.f32 %v1318, %v1319
    %v1321 = vsel %vm795, %v1309, 0.0
    %v1322 = vadd.f32 %v1320, %v1321
    %v1323 = vsel %vm795, %v1310, 0.0
    %v1324 = vadd.f32 %v1322, %v1323
    %v1325 = vsel %vm795, %v1311, 0.0
    %v1326 = vadd.f32 %v1324, %v1325
    %1327 = vadd.xlane.f32.xlu0 %v1326
    %v1328 = vpop.xlane.xlu0 %1327
    %v1329 = vrsqrt.pop %v1328
    %v1330 = vmul.f32 %v1328, %v1329
    %vm1331 = vcmp.eq.f32.partialorder %v1328, inf
    %v1332 = vsel %vm1331, %v1328, %v1330
    %vm1333 = vcmp.eq.f32.partialorder %v1328, 0.0
    %v1334 = vand.u32 %v1328, 2147483648
    %v1335 = vsel %vm1333, %v1334, %v1332
    %v1336 = vadd.f32 %v1335, 1e-08
    %v1337 = vrcp.pop %v1336
    %v1338 = vmul.f32 %v1175, %v1337
    %v1339 = vmul.f32 %v1177, %v1337
    %v1340 = vmul.f32 %v1216, %v1337
    %v1341 = vmul.f32 %v1218, %v1337
    %v1342 = vmul.f32 %v1257, %v1337
    %v1343 = vmul.f32 %v1259, %v1337
    %v1344 = vmul.f32 %v1298, %v1337
    %v1345 = vmul.f32 %v1300, %v1337
    %v1354 = vcombine.low %v1338, %v1339
    %v1355 = vcombine.low %v1340, %v1341
    %v1357 = vunpack.c.l.s4 1983009808
    %v1358 = vunpack.c.0.s8 %v1357
    %v1359 = vlaneseq
    %v1360 = vshrl.u32 %v1359, 7
    %v1361 = vsub.s32 %v1358, %v1360
    %v1362 = vrot.slane %v1354, %v1361
    %v1364 = vunpack.c.l.s4 1983009808
    %v1365 = vunpack.c.0.s8 %v1364
    %v1366 = vlaneseq
    %v1367 = vshrl.u32 %v1366, 7
    %v1368 = vsub.s32 %v1365, %v1367
    %v1369 = vrot.slane %v1355, %v1368
    %v1370 = vcombine.low %v1362, %v1369
    %v1371 = vcombine.low %v1342, %v1343
    %v1372 = vcombine.low %v1344, %v1345
    %v1374 = vunpack.c.l.s4 1983009808
    %v1375 = vunpack.c.0.s8 %v1374
    %v1376 = vlaneseq
    %v1377 = vshrl.u32 %v1376, 7
    %v1378 = vsub.s32 %v1375, %v1377
    %v1379 = vrot.slane %v1371, %v1378
    %v1381 = vunpack.c.l.s4 1983009808
    %v1382 = vunpack.c.0.s8 %v1381
    %v1383 = vlaneseq
    %v1384 = vshrl.u32 %v1383, 7
    %v1385 = vsub.s32 %v1382, %v1384
    %v1386 = vrot.slane %v1372, %v1385
    %v1387 = vcombine.low %v1379, %v1386
    %v1390 = vadd.f32 %v56, %v1370
    %v1391 = vadd.f32 %v57, %v1387
    %v1394 = vcombine.high %v1390, %v1390
    %v1396 = vunpack.c.l.s4 1983009808
    %v1397 = vunpack.c.0.s8 %v1396
    %v1398 = vlaneseq
    %v1399 = vshrl.u32 %v1398, 7
    %v1400 = vsub.s32 %v1397, %v1399
    %v1401 = vrot.slane %v1390, %v1400
    %v1403 = vunpack.c.l.s4 1983009808
    %v1404 = vunpack.c.0.s8 %v1403
    %v1405 = vlaneseq
    %v1406 = vshrl.u32 %v1405, 7
    %v1407 = vsub.s32 %v1404, %v1406
    %v1408 = vrot.slane %v1394, %v1407
    %v1409 = vcombine.high %v1401, %v1401
    %v1410 = vcombine.high %v1408, %v1408
    %v1411 = vcombine.high %v1391, %v1391
    %v1413 = vunpack.c.l.s4 1983009808
    %v1414 = vunpack.c.0.s8 %v1413
    %v1415 = vlaneseq
    %v1416 = vshrl.u32 %v1415, 7
    %v1417 = vsub.s32 %v1414, %v1416
    %v1418 = vrot.slane %v1391, %v1417
    %v1420 = vunpack.c.l.s4 1983009808
    %v1421 = vunpack.c.0.s8 %v1420
    %v1422 = vlaneseq
    %v1423 = vshrl.u32 %v1422, 7
    %v1424 = vsub.s32 %v1421, %v1423
    %v1425 = vrot.slane %v1411, %v1424
    %v1426 = vcombine.high %v1418, %v1418
    %v1427 = vcombine.high %v1425, %v1425
    %v1436 = vpack.c.bf16 %v1401, %v1401
    %v1437 = vpack.c.bf16 %v1409, %v1409
    %v1438 = vpack.c.bf16 %v1408, %v1408
    %v1439 = vpack.c.bf16 %v1410, %v1410
    %v1440 = vpack.c.bf16 %v1418, %v1418
    %v1441 = vpack.c.bf16 %v1426, %v1426
    %v1442 = vpack.c.bf16 %v1425, %v1425
    %v1443 = vpack.c.bf16 %v1427, %v1427
    %1444 = vmatprep.subr.bf16.mxu0 0
    %1445 = vmatpush1.bf16.msra.mxu0 %v504
    %1446 = vmatprep.subr.bf16.mxu0 0
    %1447 = vmatpush1.bf16.msra.mxu0 %v505
    %1448 = vmatprep.subr.bf16.mxu0 0
    %1449 = vmatpush1.bf16.msra.mxu0 %v506
    %1450 = vmatprep.subr.bf16.mxu0 0
    %1451 = vmatpush1.bf16.msra.mxu0 %v507
    %1452 = vmatprep.subr.bf16.mxu0 0
    %1453 = vmatpush1.bf16.msra.mxu0 %v508
    %1454 = vmatprep.subr.bf16.mxu0 0
    %1455 = vmatpush1.bf16.msra.mxu0 %v509
    %1456 = vmatprep.subr.bf16.mxu0 0
    %1457 = vmatpush1.bf16.msra.mxu0 %v510
    %1458 = vmatprep.subr.bf16.mxu0 0
    %1459 = vmatpush1.bf16.msra.mxu0 %v511
    %1460 = vmatprep.subr.bf16.mxu0 0
    %1461 = vmatpush1.bf16.msra.mxu0 %v512
    %1462 = vmatprep.subr.bf16.mxu0 0
    %1463 = vmatpush1.bf16.msra.mxu0 %v513
    %1464 = vmatprep.subr.bf16.mxu0 0
    %1465 = vmatpush1.bf16.msra.mxu0 %v514
    %1466 = vmatprep.subr.bf16.mxu0 0
    %1467 = vmatpush1.bf16.msra.mxu0 %v515
    %1468 = vmatprep.subr.bf16.mxu0 0
    %1469 = vmatpush1.bf16.msra.mxu0 %v516
    %1470 = vmatprep.subr.bf16.mxu0 0
    %1471 = vmatpush1.bf16.msra.mxu0 %v517
    %1472 = vmatprep.subr.bf16.mxu0 0
    %1473 = vmatpush1.bf16.msra.mxu0 %v518
    %1474 = vmatprep.subr.bf16.mxu0 0
    %1475 = vmatpush1.bf16.msra.mxu0 %v519
    %1476 = vmatprep.mubr.bf16.mxu0 %v1437
    %1477 = vmatmul.mubr.bf16.gmra.mrb[0].mxu0 %v1436
    %v1478 = vpop.f32.mrb[0].mxu0
    %v1479 = vadd.f32 %v246, %v1478
    %v1480 = vpop.f32.mrb[0].mxu0
    %v1481 = vpop.f32.mrb[0].mxu0
    %v1482 = vpop.f32.mrb[0].mxu0
    %1483 = vdwg.mxu0
    %1484 = vmatprep.subr.bf16.mxu0 0
    %1485 = vmatpush1.bf16.msra.mxu0 %v520
    %1486 = vmatprep.subr.bf16.mxu0 0
    %1487 = vmatpush1.bf16.msra.mxu0 %v521
    %1488 = vmatprep.subr.bf16.mxu0 0
    %1489 = vmatpush1.bf16.msra.mxu0 %v522
    %1490 = vmatprep.subr.bf16.mxu0 0
    %1491 = vmatpush1.bf16.msra.mxu0 %v523
    %1492 = vmatprep.subr.bf16.mxu0 0
    %1493 = vmatpush1.bf16.msra.mxu0 %v524
    %1494 = vmatprep.subr.bf16.mxu0 0
    %1495 = vmatpush1.bf16.msra.mxu0 %v525
    %1496 = vmatprep.subr.bf16.mxu0 0
    %1497 = vmatpush1.bf16.msra.mxu0 %v526
    %1498 = vmatprep.subr.bf16.mxu0 0
    %1499 = vmatpush1.bf16.msra.mxu0 %v527
    %1500 = vmatprep.subr.bf16.mxu0 0
    %1501 = vmatpush1.bf16.msra.mxu0 %v528
    %1502 = vmatprep.subr.bf16.mxu0 0
    %1503 = vmatpush1.bf16.msra.mxu0 %v529
    %1504 = vmatprep.subr.bf16.mxu0 0
    %1505 = vmatpush1.bf16.msra.mxu0 %v530
    %1506 = vmatprep.subr.bf16.mxu0 0
    %1507 = vmatpush1.bf16.msra.mxu0 %v531
    %1508 = vmatprep.subr.bf16.mxu0 0
    %1509 = vmatpush1.bf16.msra.mxu0 %v532
    %1510 = vmatprep.subr.bf16.mxu0 0
    %1511 = vmatpush1.bf16.msra.mxu0 %v533
    %1512 = vmatprep.subr.bf16.mxu0 0
    %1513 = vmatpush1.bf16.msra.mxu0 %v534
    %1514 = vmatprep.subr.bf16.mxu0 0
    %1515 = vmatpush1.bf16.msra.mxu0 %v535
    %1516 = vmatprep.mubr.bf16.mxu0 %v1439
    %1517 = vmatmul.mubr.bf16.gmra.mrb[0].mxu0 %v1438
    %v1518 = vpop.f32.mrb[0].mxu0
    %v1519 = vadd.f32 %v1479, %v1518
    %v1520 = vpop.f32.mrb[0].mxu0
    %v1521 = vpop.f32.mrb[0].mxu0
    %v1522 = vpop.f32.mrb[0].mxu0
    %1523 = vdwg.mxu0
    %1524 = vmatprep.subr.bf16.mxu0 0
    %1525 = vmatpush1.bf16.msra.mxu0 %v536
    %1526 = vmatprep.subr.bf16.mxu0 0
    %1527 = vmatpush1.bf16.msra.mxu0 %v537
    %1528 = vmatprep.subr.bf16.mxu0 0
    %1529 = vmatpush1.bf16.msra.mxu0 %v538
    %1530 = vmatprep.subr.bf16.mxu0 0
    %1531 = vmatpush1.bf16.msra.mxu0 %v539
    %1532 = vmatprep.subr.bf16.mxu0 0
    %1533 = vmatpush1.bf16.msra.mxu0 %v540
    %1534 = vmatprep.subr.bf16.mxu0 0
    %1535 = vmatpush1.bf16.msra.mxu0 %v541
    %1536 = vmatprep.subr.bf16.mxu0 0
    %1537 = vmatpush1.bf16.msra.mxu0 %v542
    %1538 = vmatprep.subr.bf16.mxu0 0
    %1539 = vmatpush1.bf16.msra.mxu0 %v543
    %1540 = vmatprep.subr.bf16.mxu0 0
    %1541 = vmatpush1.bf16.msra.mxu0 %v544
    %1542 = vmatprep.subr.bf16.mxu0 0
    %1543 = vmatpush1.bf16.msra.mxu0 %v545
    %1544 = vmatprep.subr.bf16.mxu0 0
    %1545 = vmatpush1.bf16.msra.mxu0 %v546
    %1546 = vmatprep.subr.bf16.mxu0 0
    %1547 = vmatpush1.bf16.msra.mxu0 %v547
    %1548 = vmatprep.subr.bf16.mxu0 0
    %1549 = vmatpush1.bf16.msra.mxu0 %v548
    %1550 = vmatprep.subr.bf16.mxu0 0
    %1551 = vmatpush1.bf16.msra.mxu0 %v549
    %1552 = vmatprep.subr.bf16.mxu0 0
    %1553 = vmatpush1.bf16.msra.mxu0 %v550
    %1554 = vmatprep.subr.bf16.mxu0 0
    %1555 = vmatpush1.bf16.msra.mxu0 %v551
    %1556 = vmatprep.mubr.bf16.mxu0 %v1441
    %1557 = vmatmul.mubr.bf16.gmra.mrb[0].mxu0 %v1440
    %v1558 = vpop.f32.mrb[0].mxu0
    %v1559 = vadd.f32 %v1519, %v1558
    %v1560 = vpop.f32.mrb[0].mxu0
    %v1561 = vpop.f32.mrb[0].mxu0
    %v1562 = vpop.f32.mrb[0].mxu0
    %1563 = vdwg.mxu0
    %1564 = vmatprep.subr.bf16.mxu0 0
    %1565 = vmatpush1.bf16.msra.mxu0 %v552
    %1566 = vmatprep.subr.bf16.mxu0 0
    %1567 = vmatpush1.bf16.msra.mxu0 %v553
    %1568 = vmatprep.subr.bf16.mxu0 0
    %1569 = vmatpush1.bf16.msra.mxu0 %v554
    %1570 = vmatprep.subr.bf16.mxu0 0
    %1571 = vmatpush1.bf16.msra.mxu0 %v555
    %1572 = vmatprep.subr.bf16.mxu0 0
    %1573 = vmatpush1.bf16.msra.mxu0 %v556
    %1574 = vmatprep.subr.bf16.mxu0 0
    %1575 = vmatpush1.bf16.msra.mxu0 %v557
    %1576 = vmatprep.subr.bf16.mxu0 0
    %1577 = vmatpush1.bf16.msra.mxu0 %v558
    %1578 = vmatprep.subr.bf16.mxu0 0
    %1579 = vmatpush1.bf16.msra.mxu0 %v559
    %1580 = vmatprep.subr.bf16.mxu0 0
    %1581 = vmatpush1.bf16.msra.mxu0 %v560
    %1582 = vmatprep.subr.bf16.mxu0 0
    %1583 = vmatpush1.bf16.msra.mxu0 %v561
    %1584 = vmatprep.subr.bf16.mxu0 0
    %1585 = vmatpush1.bf16.msra.mxu0 %v562
    %1586 = vmatprep.subr.bf16.mxu0 0
    %1587 = vmatpush1.bf16.msra.mxu0 %v563
    %1588 = vmatprep.subr.bf16.mxu0 0
    %1589 = vmatpush1.bf16.msra.mxu0 %v564
    %1590 = vmatprep.subr.bf16.mxu0 0
    %1591 = vmatpush1.bf16.msra.mxu0 %v565
    %1592 = vmatprep.subr.bf16.mxu0 0
    %1593 = vmatpush1.bf16.msra.mxu0 %v566
    %1594 = vmatprep.subr.bf16.mxu0 0
    %1595 = vmatpush1.bf16.msra.mxu0 %v567
    %1596 = vmatprep.mubr.bf16.mxu0 %v1443
    %1597 = vmatmul.mubr.bf16.gmra.mrb[0].mxu0 %v1442
    %v1598 = vpop.f32.mrb[0].mxu0
    %v1599 = vadd.f32 %v1559, %v1598
    %v1600 = vpop.f32.mrb[0].mxu0
    %v1601 = vpop.f32.mrb[0].mxu0
    %v1602 = vpop.f32.mrb[0].mxu0
    %1603 = vdwg.mxu0
    %v1604 = vsel %vm793, %v1599, -1e+30
    %v1605 = vsel %vm795, %v1604, -inf
    %1606 = vmax.xlane.f32.xlu0 %v1605
    %v1607 = vpop.xlane.xlu0 %1606
    %v1608 = vsub.f32 %v1604, %v1607
    %v1609 = vmul.f32 %v1608, 1.442695
    %v1610 = vpow.pop %v1609
    %v1611 = vsel %vm793, %v1610, 0.0
    %v1612 = vsel %vm795, %v1611, 0.0
    %1613 = vadd.xlane.f32.xlu0 %v1612
    %v1614 = vpop.xlane.xlu0 %1613
    %v1615 = vlog2.pop %v1614
    %v1616 = vmul.f32 %v1615, 0.6931472
    %v1617 = vsub.f32 %v1608, %v1616
    %v1618 = vsel %vm793, %v1617, 0.0
    %v1619 = vmul.f32 %v811, %v1618
    %v1620 = vsel %vm795, %v1619, 0.0
    %1621 = vadd.xlane.f32.xlu0 %v1620
    %v1622 = vpop.xlane.xlu0 %1621
    %v1623 = vrot.slane %v1622, 4
    %v1624 = vadd.f32 %v1622, %v1623
    %v1625 = vrot.slane %v1624, 2
    %v1626 = vadd.f32 %v1624, %v1625
    %v1627 = vrot.slane %v1626, 1
    %v1628 = vadd.f32 %v1626, %v1627
    %s1629 = vtos %v1628
    %v1630 = vstv %s1629
    %v1631 = vsub.f32 %v823, %v1630
    %v1632 = vmul.f32 %v1631, 0.5
    %vm1633 = vcmask 0
    %1634 = vst.msk [vmem:[#allocation8] sm:$0x1] %vm1633, %v1632
    // Predicated region
    $region30: #{tpu_custom_call.1} parent=1 // pred_check
      _
    $region31: #{tpu_custom_call.1} parent=1 // pred_check_branch
      %1636 = sbr.rel (0) target = $region33
    $region32: #{tpu_custom_call.1} parent=1 // pred_region
      %s1638 = ssub.s32 16, 16
      %1639 = vsyncadd [#allocation4], %s1638
      %s1641 = sshll.u32 [#allocation8], 4
      %s1642 = int_to_ptr.vmem [resolvable:$true] %s1641
      %1644 = dma.vmem_to_hbm [thread:$0]  %s1642, 16, %s4, [#allocation4]
    $region33: #{tpu_custom_call.1} parent=1 // pred_fallthru
      _
    // Predicated region
    $region34: #{tpu_custom_call.1} parent=1 // pred_check
      _
    $region35: #{tpu_custom_call.1} parent=1 // pred_check_branch
      %1646 = sbr.rel (0) target = $region37
    $region36: #{tpu_custom_call.1} parent=1 // pred_region
      %1647 = dma.done [#allocation4], 16
    $region37: #{tpu_custom_call.1} parent=1 // pred_fallthru
      _
    %1648 = vsyncpa [#allocation3], 1
    %1649 = vsyncpa [#allocation6], 1
    %1650 = vsyncpa [#allocation4], 1

</llo_original>
